<compile_context>
chip_gen: v7x
topology: tpu7x:2x2x1
jax: 0.10.0
libtpu: 0.0.40
codegen_flags: <defaults>
</compile_context>

<pallas_src>
import functools

import numpy as np
import jax
import jax.numpy as jnp
from jax.experimental import pallas as pl
from jax.experimental.pallas import tpu as pltpu


def _ham_kernel(h_ref, out_ref, *, L, J_1, chunk_c):
    """Build one (tile_r, full_width) block of the dense spin-chain Hamiltonian.

    h_ref:   (L,) SMEM vector, h_i = B_0*cos(phi_i) + B_ext
    out_ref: (tile_r, tile_c) VMEM output block (tile_c == full padded width)
    """
    tile_r, tile_c = out_ref.shape
    n_chunks = tile_c // chunk_c
    r0 = pl.program_id(0) * tile_r

    rows = r0 + jax.lax.broadcasted_iota(jnp.int32, (tile_r, 1), 0)  # (tr, 1)

    # --- Per-row diagonal value (field + ZZ bonds), shape (tile_r, 1).
    sz_prev = ((rows >> 0) & 1).astype(jnp.float32) - 0.5
    diag = h_ref[0] * sz_prev
    for i in range(1, L):
        sz_i = ((rows >> i) & 1).astype(jnp.float32) - 0.5
        diag = diag + h_ref[i] * sz_i + jnp.float32(J_1) * sz_prev * sz_i
        sz_prev = sz_i

    # --- Per-row neighbour-difference bits: bit i of rdiff == (r_i XOR r_{i+1}).
    rdiff = rows ^ (rows >> 1)                                       # (tr, 1)

    half_j = jnp.float32(0.5 * J_1)
    zero = jnp.float32(0.0)

    def emit_chunk(c):
        if isinstance(c, int):
            col0 = c * chunk_c
        else:
            col0 = pl.multiple_of(c * chunk_c, chunk_c)
        cols = col0 + jax.lax.broadcasted_iota(jnp.int32, (1, chunk_c), 1)

        # Off-diagonal flip-flop term, constant cost in L:
        # H[r,c] = J_1/2 iff xor = r^c has exactly two set bits, they are
        # adjacent, and the two corresponding bits of r differ.
        xor = rows ^ cols                       # (tile_r, chunk_c)
        lsb = xor & (-xor)                      # lowest set bit (0 if xor==0)
        adj = xor == ((lsb << 1) | lsb)         # two adjacent bits (or xor==0)
        hop = adj & ((rdiff & lsb) != 0)        # False when xor==0 (lsb==0)
        off = jnp.where(hop, half_j, zero)

        # Only chunks that intersect the diagonal pay the diag compare/select.
        intersects = (col0 < r0 + tile_r) & (r0 < col0 + chunk_c)

        @pl.when(intersects)
        def _():
            out_ref[:, pl.ds(col0, chunk_c)] = jnp.where(xor == 0, diag, off)

        @pl.when(jnp.logical_not(intersects))
        def _():
            out_ref[:, pl.ds(col0, chunk_c)] = off

    if n_chunks == 1:
        emit_chunk(0)
    else:
        @pl.loop(0, n_chunks)
        def _(c):
            emit_chunk(c)


def _floor_pow2(x):
    return 1 << (max(int(x), 1).bit_length() - 1)


def _vmem_capacity_bytes():
    """Physical VMEM of the current TPU; conservative fallback if unknown."""
    try:
        return int(pltpu.get_tpu_info().vmem_capacity_bytes)
    except Exception:
        return 64 * 1024 * 1024   # v7x per-core size (smallest of v5e/v6e/v7x)


def _choose_tiles(dim_r, dim_c, vmem_bytes):
    """Full-width row tiles sized from a generation-aware VMEM byte cap."""
    # Output block cap = VMEM/8: 16 MiB on 128-MiB v5e/v6e, 8 MiB on 64-MiB
    # v7x.  Double-buffered output then uses ~1/4 of physical VMEM.
    cap_bytes = max(1 << 20, vmem_bytes // 8)
    tile_c = dim_c                                   # full-width blocks
    max_rows = max(8, cap_bytes // (tile_c * 4))
    tile_r = max(8, _floor_pow2(min(dim_r, max_rows)))
    # Keep >= 2 grid steps when possible.  dim_r and tile_r are powers of two,
    # so any step count > 1 is even -> equal megacore split on v7x.
    if dim_r // tile_r == 1 and tile_r > 8:
        tile_r //= 2
    # In-kernel column-chunk width (~0.5 MiB of f32) bounds the live
    # elementwise intermediates (xor/lsb/masks) independent of block size.
    chunk_c = min(tile_c, max(128, _floor_pow2((512 * 1024) // (4 * tile_r))))
    return tile_r, tile_c, chunk_c


def build_hamiltonian(L, J_1, B_0, B_ext, phi_i):
    """Dense Hamiltonian (2^L, 2^L) float32 built by the Pallas kernel."""
    dim = 1 << L
    # Pad to TPU-friendly shapes (rows multiple of 8, cols multiple of 128).
    dim_r = max(dim, 8)
    dim_c = max(dim, 128)

    vmem_bytes = _vmem_capacity_bytes()
    tile_r, tile_c, chunk_c = _choose_tiles(dim_r, dim_c, vmem_bytes)
    vmem_limit = int(min(64 * 1024 * 1024, (vmem_bytes * 3) // 4))

    # Precompute per-site field h_i = B_0*cos(phi_i) + B_ext on host.
    h = (jnp.asarray(B_0, jnp.float32) * jnp.cos(jnp.asarray(phi_i, jnp.float32))
         + jnp.asarray(B_ext, jnp.float32)).reshape(L)

    kernel = functools.partial(_ham_kernel, L=L, J_1=float(J_1),
                               chunk_c=chunk_c)
    smem_spec = pl.BlockSpec(memory_space=pltpu.MemorySpace.SMEM)

    H = pl.pallas_call(
        kernel,
        out_shape=jax.ShapeDtypeStruct((dim_r, dim_c), jnp.float32),
        grid=(dim_r // tile_r,),
        in_specs=[smem_spec],
        out_specs=pl.BlockSpec((tile_r, tile_c), lambda i: (i, 0)),
        compiler_params=pltpu.CompilerParams(
            dimension_semantics=("parallel",),
            vmem_limit_bytes=vmem_limit),
    )(h)

    if (dim_r, dim_c) != (dim, dim):
        H = H[:dim, :dim]
    return H


class HamModuleJax:
    """JAX/Pallas port of HamModule (deterministic, in-script parameters)."""

    def __init__(self, L, J_1, B_0, B_ext):
        self.L = L
        self.J_1 = J_1
        self.B_0 = jnp.array([B_0], jnp.float32)        # nn.Parameter
        self.B_ext = jnp.array([B_ext], jnp.float32)    # nn.Parameter
        self.phi_i = jnp.zeros((L,), jnp.float32)       # buffer

    def make_ham_and_solve(self, n_eigs):
        H = build_hamiltonian(self.L, self.J_1, self.B_0[0], self.B_ext[0],
                              self.phi_i)
        # TODO(synk): xitorch's Davidson iterative eigensolver (and, for large
        # L, a matrix-free H@v Pallas matvec) has no clean Pallas equivalent;
        # use dense eigh as glue.
        eigvals, eigvecs = jnp.linalg.eigh(H)
        return eigvals[:n_eigs], eigvecs[:, :n_eigs]

    def forward(self, n_eigs):
        # Original forward is `pass`; expose the real compute path here.
        return self.make_ham_and_solve(n_eigs)


def _reference_ham(L, J_1, B_0, B_ext, phi):
    """Plain numpy reference of the same Hamiltonian (for small L checks)."""
    dim = 1 << L
    H = np.zeros((dim, dim), np.float64)
    h = B_0 * np.cos(phi) + B_ext
    for r in range(dim):
        sz = np.array([((r >> i) & 1) - 0.5 for i in range(L)])
        H[r, r] = float(np.sum(h * sz) + J_1 * np.sum(sz[:-1] * sz[1:]))
        for i in range(L - 1):
            if ((r >> i) & 1) != ((r >> (i + 1)) & 1):
                c = r ^ ((1 << i) | (1 << (i + 1)))
                H[r, c] = 0.5 * J_1
    return H


if __name__ == "__main__":
    # Small, deterministic setup consistent with the module's __init__.
    L = 8            # spin-chain length -> Hilbert-space dim 2^8 = 256
    J_1 = 1.0
    key = jax.random.PRNGKey(0)
    k0, k1 = jax.random.split(key)
    B_0 = float(jax.random.uniform(k0, (), minval=0.1, maxval=1.0))
    B_ext = float(jax.random.uniform(k1, (), minval=0.0, maxval=0.5))

    mod = HamModuleJax(L, J_1, B_0, B_ext)

    # Run the Pallas Hamiltonian-build kernel once.
    H = build_hamiltonian(L, J_1, mod.B_0[0], mod.B_ext[0], mod.phi_i)
    H = jax.block_until_ready(H)

    # Sanity: symmetric and equal to a direct reference construction.
    assert bool(jnp.allclose(H, H.T, atol=1e-6))
    H_ref = _reference_ham(L, J_1, B_0, B_ext, np.zeros(L))
    assert np.allclose(np.asarray(H), H_ref, atol=1e-5)

    eigvals, eigvecs = mod.forward(n_eigs=4)
    jax.block_until_ready((eigvals, eigvecs))

    print("KERNEL_OK")
</pallas_src>

<mosaic_0001>
module attributes {stable_mosaic.version = 11 : i64} {
  func.func @_ham_kernel(%arg0: i32, %arg1: memref<8xf32, #tpu.memory_space<smem>>, %arg2: memref<128x256xf32, #tpu.memory_space<vmem>>) attributes {dimension_semantics = [#tpu.dimension_semantics<parallel>], iteration_bounds = array<i64: 2>, scalar_prefetch = 0 : i64, scratch_operands = 0 : i64, tpu.core_type = #tpu.core_type<tc>, window_params = [{transform_indices = @transform_0, window_bounds = array<i64: 8>}, {transform_indices = @transform_1, window_bounds = array<i64: 128, 256>}]} {
    %c128_i32 = arith.constant 128 : i32
    %0 = arith.muli %arg0, %c128_i32 : i32
    %1 = tpu.iota {dimensions = array<i32: 0>} : vector<128x1xi32>
    %2 = vector.broadcast %0 : i32 to vector<128x1xi32>
    %3 = arith.addi %2, %1 : vector<128x1xi32>
    %c0_i32 = arith.constant 0 : i32
    %4 = vector.broadcast %c0_i32 : i32 to vector<128x1xi32>
    %5 = arith.shrsi %3, %4 : vector<128x1xi32>
    %c1_i32 = arith.constant 1 : i32
    %6 = vector.broadcast %c1_i32 : i32 to vector<128x1xi32>
    %7 = arith.andi %5, %6 : vector<128x1xi32>
    %8 = arith.sitofp %7 : vector<128x1xi32> to vector<128x1xf32>
    %cst = arith.constant 5.000000e-01 : f32
    %9 = vector.broadcast %cst : f32 to vector<128x1xf32>
    %10 = arith.subf %8, %9 : vector<128x1xf32>
    %c0 = arith.constant 0 : index
    %11 = memref.load %arg1[%c0] : memref<8xf32, #tpu.memory_space<smem>>
    %12 = vector.broadcast %11 : f32 to vector<128x1xf32>
    %13 = arith.mulf %12, %10 : vector<128x1xf32>
    %c1_i32_0 = arith.constant 1 : i32
    %14 = vector.broadcast %c1_i32_0 : i32 to vector<128x1xi32>
    %15 = arith.shrsi %3, %14 : vector<128x1xi32>
    %c1_i32_1 = arith.constant 1 : i32
    %16 = vector.broadcast %c1_i32_1 : i32 to vector<128x1xi32>
    %17 = arith.andi %15, %16 : vector<128x1xi32>
    %18 = arith.sitofp %17 : vector<128x1xi32> to vector<128x1xf32>
    %cst_2 = arith.constant 5.000000e-01 : f32
    %19 = vector.broadcast %cst_2 : f32 to vector<128x1xf32>
    %20 = arith.subf %18, %19 : vector<128x1xf32>
    %c1 = arith.constant 1 : index
    %21 = memref.load %arg1[%c1] : memref<8xf32, #tpu.memory_space<smem>>
    %22 = vector.broadcast %21 : f32 to vector<128x1xf32>
    %23 = arith.mulf %22, %20 : vector<128x1xf32>
    %24 = arith.addf %13, %23 : vector<128x1xf32>
    %cst_3 = arith.constant 1.000000e+00 : f32
    %25 = vector.broadcast %cst_3 : f32 to vector<128x1xf32>
    %26 = arith.mulf %25, %10 : vector<128x1xf32>
    %27 = arith.mulf %26, %20 : vector<128x1xf32>
    %28 = arith.addf %24, %27 : vector<128x1xf32>
    %c2_i32 = arith.constant 2 : i32
    %29 = vector.broadcast %c2_i32 : i32 to vector<128x1xi32>
    %30 = arith.shrsi %3, %29 : vector<128x1xi32>
    %c1_i32_4 = arith.constant 1 : i32
    %31 = vector.broadcast %c1_i32_4 : i32 to vector<128x1xi32>
    %32 = arith.andi %30, %31 : vector<128x1xi32>
    %33 = arith.sitofp %32 : vector<128x1xi32> to vector<128x1xf32>
    %cst_5 = arith.constant 5.000000e-01 : f32
    %34 = vector.broadcast %cst_5 : f32 to vector<128x1xf32>
    %35 = arith.subf %33, %34 : vector<128x1xf32>
    %c2 = arith.constant 2 : index
    %36 = memref.load %arg1[%c2] : memref<8xf32, #tpu.memory_space<smem>>
    %37 = vector.broadcast %36 : f32 to vector<128x1xf32>
    %38 = arith.mulf %37, %35 : vector<128x1xf32>
    %39 = arith.addf %28, %38 : vector<128x1xf32>
    %cst_6 = arith.constant 1.000000e+00 : f32
    %40 = vector.broadcast %cst_6 : f32 to vector<128x1xf32>
    %41 = arith.mulf %40, %20 : vector<128x1xf32>
    %42 = arith.mulf %41, %35 : vector<128x1xf32>
    %43 = arith.addf %39, %42 : vector<128x1xf32>
    %c3_i32 = arith.constant 3 : i32
    %44 = vector.broadcast %c3_i32 : i32 to vector<128x1xi32>
    %45 = arith.shrsi %3, %44 : vector<128x1xi32>
    %c1_i32_7 = arith.constant 1 : i32
    %46 = vector.broadcast %c1_i32_7 : i32 to vector<128x1xi32>
    %47 = arith.andi %45, %46 : vector<128x1xi32>
    %48 = arith.sitofp %47 : vector<128x1xi32> to vector<128x1xf32>
    %cst_8 = arith.constant 5.000000e-01 : f32
    %49 = vector.broadcast %cst_8 : f32 to vector<128x1xf32>
    %50 = arith.subf %48, %49 : vector<128x1xf32>
    %c3 = arith.constant 3 : index
    %51 = memref.load %arg1[%c3] : memref<8xf32, #tpu.memory_space<smem>>
    %52 = vector.broadcast %51 : f32 to vector<128x1xf32>
    %53 = arith.mulf %52, %50 : vector<128x1xf32>
    %54 = arith.addf %43, %53 : vector<128x1xf32>
    %cst_9 = arith.constant 1.000000e+00 : f32
    %55 = vector.broadcast %cst_9 : f32 to vector<128x1xf32>
    %56 = arith.mulf %55, %35 : vector<128x1xf32>
    %57 = arith.mulf %56, %50 : vector<128x1xf32>
    %58 = arith.addf %54, %57 : vector<128x1xf32>
    %c4_i32 = arith.constant 4 : i32
    %59 = vector.broadcast %c4_i32 : i32 to vector<128x1xi32>
    %60 = arith.shrsi %3, %59 : vector<128x1xi32>
    %c1_i32_10 = arith.constant 1 : i32
    %61 = vector.broadcast %c1_i32_10 : i32 to vector<128x1xi32>
    %62 = arith.andi %60, %61 : vector<128x1xi32>
    %63 = arith.sitofp %62 : vector<128x1xi32> to vector<128x1xf32>
    %cst_11 = arith.constant 5.000000e-01 : f32
    %64 = vector.broadcast %cst_11 : f32 to vector<128x1xf32>
    %65 = arith.subf %63, %64 : vector<128x1xf32>
    %c4 = arith.constant 4 : index
    %66 = memref.load %arg1[%c4] : memref<8xf32, #tpu.memory_space<smem>>
    %67 = vector.broadcast %66 : f32 to vector<128x1xf32>
    %68 = arith.mulf %67, %65 : vector<128x1xf32>
    %69 = arith.addf %58, %68 : vector<128x1xf32>
    %cst_12 = arith.constant 1.000000e+00 : f32
    %70 = vector.broadcast %cst_12 : f32 to vector<128x1xf32>
    %71 = arith.mulf %70, %50 : vector<128x1xf32>
    %72 = arith.mulf %71, %65 : vector<128x1xf32>
    %73 = arith.addf %69, %72 : vector<128x1xf32>
    %c5_i32 = arith.constant 5 : i32
    %74 = vector.broadcast %c5_i32 : i32 to vector<128x1xi32>
    %75 = arith.shrsi %3, %74 : vector<128x1xi32>
    %c1_i32_13 = arith.constant 1 : i32
    %76 = vector.broadcast %c1_i32_13 : i32 to vector<128x1xi32>
    %77 = arith.andi %75, %76 : vector<128x1xi32>
    %78 = arith.sitofp %77 : vector<128x1xi32> to vector<128x1xf32>
    %cst_14 = arith.constant 5.000000e-01 : f32
    %79 = vector.broadcast %cst_14 : f32 to vector<128x1xf32>
    %80 = arith.subf %78, %79 : vector<128x1xf32>
    %c5 = arith.constant 5 : index
    %81 = memref.load %arg1[%c5] : memref<8xf32, #tpu.memory_space<smem>>
    %82 = vector.broadcast %81 : f32 to vector<128x1xf32>
    %83 = arith.mulf %82, %80 : vector<128x1xf32>
    %84 = arith.addf %73, %83 : vector<128x1xf32>
    %cst_15 = arith.constant 1.000000e+00 : f32
    %85 = vector.broadcast %cst_15 : f32 to vector<128x1xf32>
    %86 = arith.mulf %85, %65 : vector<128x1xf32>
    %87 = arith.mulf %86, %80 : vector<128x1xf32>
    %88 = arith.addf %84, %87 : vector<128x1xf32>
    %c6_i32 = arith.constant 6 : i32
    %89 = vector.broadcast %c6_i32 : i32 to vector<128x1xi32>
    %90 = arith.shrsi %3, %89 : vector<128x1xi32>
    %c1_i32_16 = arith.constant 1 : i32
    %91 = vector.broadcast %c1_i32_16 : i32 to vector<128x1xi32>
    %92 = arith.andi %90, %91 : vector<128x1xi32>
    %93 = arith.sitofp %92 : vector<128x1xi32> to vector<128x1xf32>
    %cst_17 = arith.constant 5.000000e-01 : f32
    %94 = vector.broadcast %cst_17 : f32 to vector<128x1xf32>
    %95 = arith.subf %93, %94 : vector<128x1xf32>
    %c6 = arith.constant 6 : index
    %96 = memref.load %arg1[%c6] : memref<8xf32, #tpu.memory_space<smem>>
    %97 = vector.broadcast %96 : f32 to vector<128x1xf32>
    %98 = arith.mulf %97, %95 : vector<128x1xf32>
    %99 = arith.addf %88, %98 : vector<128x1xf32>
    %cst_18 = arith.constant 1.000000e+00 : f32
    %100 = vector.broadcast %cst_18 : f32 to vector<128x1xf32>
    %101 = arith.mulf %100, %80 : vector<128x1xf32>
    %102 = arith.mulf %101, %95 : vector<128x1xf32>
    %103 = arith.addf %99, %102 : vector<128x1xf32>
    %c7_i32 = arith.constant 7 : i32
    %104 = vector.broadcast %c7_i32 : i32 to vector<128x1xi32>
    %105 = arith.shrsi %3, %104 : vector<128x1xi32>
    %c1_i32_19 = arith.constant 1 : i32
    %106 = vector.broadcast %c1_i32_19 : i32 to vector<128x1xi32>
    %107 = arith.andi %105, %106 : vector<128x1xi32>
    %108 = arith.sitofp %107 : vector<128x1xi32> to vector<128x1xf32>
    %cst_20 = arith.constant 5.000000e-01 : f32
    %109 = vector.broadcast %cst_20 : f32 to vector<128x1xf32>
    %110 = arith.subf %108, %109 : vector<128x1xf32>
    %c7 = arith.constant 7 : index
    %111 = memref.load %arg1[%c7] : memref<8xf32, #tpu.memory_space<smem>>
    %112 = vector.broadcast %111 : f32 to vector<128x1xf32>
    %113 = arith.mulf %112, %110 : vector<128x1xf32>
    %114 = arith.addf %103, %113 : vector<128x1xf32>
    %cst_21 = arith.constant 1.000000e+00 : f32
    %115 = vector.broadcast %cst_21 : f32 to vector<128x1xf32>
    %116 = arith.mulf %115, %95 : vector<128x1xf32>
    %117 = arith.mulf %116, %110 : vector<128x1xf32>
    %118 = arith.addf %114, %117 : vector<128x1xf32>
    %c1_i32_22 = arith.constant 1 : i32
    %119 = vector.broadcast %c1_i32_22 : i32 to vector<128x1xi32>
    %120 = arith.shrsi %3, %119 : vector<128x1xi32>
    %121 = arith.xori %3, %120 : vector<128x1xi32>
    %122 = tpu.iota {dimensions = array<i32: 1>} : vector<1x256xi32>
    %c0_i32_23 = arith.constant 0 : i32
    %123 = vector.broadcast %c0_i32_23 : i32 to vector<1x256xi32>
    %124 = arith.addi %123, %122 : vector<1x256xi32>
    %125 = vector.broadcast %3 : vector<128x1xi32> to vector<128x256xi32>
    %126 = vector.broadcast %124 : vector<1x256xi32> to vector<128x256xi32>
    %127 = arith.xori %125, %126 : vector<128x256xi32>
    %c0_i32_24 = arith.constant 0 : i32
    %128 = vector.broadcast %c0_i32_24 : i32 to vector<128x256xi32>
    %129 = arith.subi %128, %127 : vector<128x256xi32>
    %130 = arith.andi %127, %129 : vector<128x256xi32>
    %c1_i32_25 = arith.constant 1 : i32
    %131 = vector.broadcast %c1_i32_25 : i32 to vector<128x256xi32>
    %132 = arith.shli %130, %131 : vector<128x256xi32>
    %133 = arith.ori %132, %130 : vector<128x256xi32>
    %134 = arith.cmpi eq, %127, %133 : vector<128x256xi32>
    %135 = vector.broadcast %121 : vector<128x1xi32> to vector<128x256xi32>
    %136 = arith.andi %135, %130 : vector<128x256xi32>
    %c0_i32_26 = arith.constant 0 : i32
    %137 = vector.broadcast %c0_i32_26 : i32 to vector<128x256xi32>
    %138 = arith.cmpi ne, %136, %137 : vector<128x256xi32>
    %139 = arith.andi %134, %138 : vector<128x256xi1>
    %cst_27 = arith.constant 5.000000e-01 : f32
    %cst_28 = arith.constant 0.000000e+00 : f32
    %140 = vector.broadcast %cst_27 : f32 to vector<128x256xf32>
    %141 = vector.broadcast %cst_28 : f32 to vector<128x256xf32>
    %142 = arith.select %139, %140, %141 : vector<128x256xi1>, vector<128x256xf32>
    %c128_i32_29 = arith.constant 128 : i32
    %143 = arith.addi %0, %c128_i32_29 : i32
    %c0_i32_30 = arith.constant 0 : i32
    %144 = arith.cmpi sgt, %143, %c0_i32_30 : i32
    %c256_i32 = arith.constant 256 : i32
    %145 = arith.cmpi slt, %0, %c256_i32 : i32
    %146 = arith.andi %144, %145 : i1
    %147 = arith.extui %146 : i1 to i32
    %c0_i32_31 = arith.constant 0 : i32
    %148 = arith.cmpi ne, %147, %c0_i32_31 : i32
    scf.if %148 {
      %c0_i32_33 = arith.constant 0 : i32
      %152 = vector.broadcast %c0_i32_33 : i32 to vector<128x256xi32>
      %153 = arith.cmpi eq, %127, %152 : vector<128x256xi32>
      %154 = vector.shape_cast %118 : vector<128x1xf32> to vector<128x1xf32>
      %155 = vector.broadcast %154 : vector<128x1xf32> to vector<128x256xf32>
      %156 = arith.select %153, %155, %142 : vector<128x256xi1>, vector<128x256xf32>
      %c0_34 = arith.constant 0 : index
      %c0_35 = arith.constant 0 : index
      %157 = vector.load %arg2[%c0_34, %c0_35] : memref<128x256xf32, #tpu.memory_space<vmem>>, vector<128x256xf32>
      tpu.vector_store %arg2[%c0_34, %c0_35], %156 {strides = array<i32>} : memref<128x256xf32, #tpu.memory_space<vmem>>, vector<128x256xf32>,
    } else {
    }
    %true = arith.constant true
    %149 = arith.xori %146, %true : i1
    %150 = arith.extui %149 : i1 to i32
    %c0_i32_32 = arith.constant 0 : i32
    %151 = arith.cmpi ne, %150, %c0_i32_32 : i32
    scf.if %151 {
      %c0_33 = arith.constant 0 : index
      %c0_34 = arith.constant 0 : index
      %152 = vector.load %arg2[%c0_33, %c0_34] : memref<128x256xf32, #tpu.memory_space<vmem>>, vector<128x256xf32>
      tpu.vector_store %arg2[%c0_33, %c0_34], %142 {strides = array<i32>} : memref<128x256xf32, #tpu.memory_space<vmem>>, vector<128x256xf32>,
    } else {
    }
    return
  }
  func.func @transform_0(%arg0: i32) -> i32 {
    %c0_i32 = arith.constant 0 : i32
    %c0_i32_0 = arith.constant 0 : i32
    return %c0_i32 : i32
  }
  func.func @transform_1(%arg0: i32) -> (i32, i32) {
    %c0_i32 = arith.constant 0 : i32
    %c0_i32_0 = arith.constant 0 : i32
    return %arg0, %c0_i32 : i32, i32
  }
}

</mosaic_0001>

<llo_original>
// kernel: tpu_custom_call.1
$region0: #{tpu_custom_call.1}
  #allocation0 [shape = 'u32[]', space=smem, size = 0x4, offset = 0x4, fixed_abs, tag = 'smem constant byte address 0x4 - core index']
  #allocation1 [shape = 'u32[144,128]{1,0:T(1,128)}', space=vmem, size = 0x12000, scoped, tag = 'internal scratch']
  %s0 = inlined_call_operand.hbm [shape: f32[8], index: 0, kind: input, shape index: {}]
  %s1 = inlined_call_operand.hbm [shape: f32[256,256], index: 1, kind: output, shape index: {}]
  %s2 = sld [smem:[#allocation0]]
  $region49: #{tpu_custom_call.1} parent=0
    _
  %s4 = ssub.s32 1, %s2
  %s5 = scalar_select 0, %s4, %s2
  $region1: #{tpu_custom_call.1} parent=0
    #allocation2 [shape = 'u8[512]{0}', space=smem, size = 0x200, scoped, tag = 'input window, operand 0, single buffered']
    #allocation3 [shape = 's32[2]{0}', space=sflag, size = 0x8, scoped, tag = 'scoped memory for tpu_custom_call.1']
    #allocation4 [shape = 's32[2]{0}', space=sflag, size = 0x8, scoped, tag = 'scoped memory for tpu_custom_call.1']
    #allocation5 [shape = 'u8[262144]{0}', space=vmem, size = 0x40000, scoped, tag = 'output window, operand 0']
    %6 = vsyncpa [#allocation4], 0
    %7 = vsyncpa [#allocation3], 0
    %s8 = scalar_lea.sflag [#allocation3], 1
    %9 = vsyncpa %s8, 0
    loop: start=0, step=1, limit=4
    $region2: #{tpu_custom_call.1} parent=1 // loop_pre_header
      _
    $region3: #{tpu_custom_call.1} parent=1 // loop_header
      %s11 = sphi 0, %s15
      %p12 = scmp.ge.s32.totalorder %s11, 4
      %s19 = sphi 0, %s19
      %s21 = sphi 0, %s19
      %s22 = sphi 0, %s21
      %s36 = sphi 0, %s22
      %s42 = sphi 0, %s44
      %s45 = sphi 0, %s42
      %s46 = sphi 0, %s45
      %s62 = sphi 0, %s46
    $region4: #{tpu_custom_call.1} parent=1 // loop_header_branch
      %14 = sbr.rel (%p12) target = $region8
    $region5: #{tpu_custom_call.1} parent=1 // loop_body
      %s16 = ssub.s32 %s11, 1
      %s17 = ssub.s32 %s11, 2
      %s18 = sadd.s32 %s11, 1
      %s20 = sadd.s32 %s19, 1
      %p23 = scmp.eq.s32.totalorder %s11, 1
      %p24 = scmp.ne.s32.totalorder %s19, %s21
      %p25 = scmp.eq.s32.totalorder %s11, 0
      %p26 = por %p24, %p25
      %p27 = scmp.ne.s32.totalorder %s19, %s21
      %p28 = scmp.eq.s32.totalorder %s16, 1
      %p29 = por %p27, %p28
      %p30 = scmp.ne.s32.totalorder %s21, %s22
      %p31 = scmp.eq.s32.totalorder %s16, 0
      %p32 = por %p30, %p31
      %p33 = scmp.ne.s32.totalorder %s21, %s22
      %p34 = scmp.eq.s32.totalorder %s17, 1
      %p35 = por %p33, %p34
      %p37 = scmp.ne.s32.totalorder %s22, %s36
      %p38 = scmp.eq.s32.totalorder %s17, 0
      %p39 = por %p37, %p38
      %s40 = ssub.s32 %s11, %s18
      %p41 = scmp.eq.s32.totalorder %s40, 0
      %s43 = sadd.s32 %s42, 1
      %s44 = scalar_select %p41, %s42, %s43
      %p47 = pneg %p41
      %p48 = scmp.eq.s32.totalorder %s11, 1
      %p49 = por %p47, %p48
      %p50 = scmp.ne.s32.totalorder %s42, %s45
      %p51 = scmp.eq.s32.totalorder %s11, 0
      %p52 = por %p50, %p51
      %p53 = scmp.ne.s32.totalorder %s42, %s45
      %p54 = scmp.eq.s32.totalorder %s16, 1
      %p55 = por %p53, %p54
      %p56 = scmp.ne.s32.totalorder %s45, %s46
      %p57 = scmp.eq.s32.totalorder %s16, 0
      %p58 = por %p56, %p57
      %p59 = scmp.ne.s32.totalorder %s45, %s46
      %p60 = scmp.eq.s32.totalorder %s17, 1
      %p61 = por %p59, %p60
      %p63 = scmp.ne.s32.totalorder %s46, %s62
      %p64 = scmp.eq.s32.totalorder %s17, 0
      %p65 = por %p63, %p64
      %p66 = scmp.le.s32.totalorder 1, %s11
      %p67 = scmp.lt.s32.totalorder %s11, 3
      %p68 = pnand %p66, %p67
      %p69 = pneg %p68
      // Predicated region
      $region9: #{tpu_custom_call.1} parent=5 // pred_check
        _
      $region10: #{tpu_custom_call.1} parent=5 // pred_check_branch
        %71 = sbr.rel (%p68) target = $region12
      $region11: #{tpu_custom_call.1} parent=5 // pred_region
        %s72 = ssub.s32 %s11, 1
        // Predicated region
        $region13: #{tpu_custom_call.1} parent=11 // pred_check
          %p73 = pneg %p32
        $region14: #{tpu_custom_call.1} parent=11 // pred_check_branch
          %75 = sbr.rel (%p73) target = $region16
        $region15: #{tpu_custom_call.1} parent=11 // pred_region
          %s77 = ssub.s32 16, 16
          %78 = vsyncadd [#allocation4], %s77
          %81 = dma.hbm_to_smem %s0, 16, [#allocation2], [#allocation4]
        $region16: #{tpu_custom_call.1} parent=11 // pred_fallthru
          _
      $region12: #{tpu_custom_call.1} parent=5 // pred_fallthru
        _
      %p82 = scmp.lt.s32.totalorder %s11, 2
      // Predicated region
      $region17: #{tpu_custom_call.1} parent=5 // pred_check
        %p83 = pneg %p82
      $region18: #{tpu_custom_call.1} parent=5 // pred_check_branch
        %85 = sbr.rel (%p83) target = $region20
      $region19: #{tpu_custom_call.1} parent=5 // pred_region
        _
      $region20: #{tpu_custom_call.1} parent=5 // pred_fallthru
        _
      %p86 = scmp.le.s32.totalorder 1, %s11
      %p87 = scmp.lt.s32.totalorder %s11, 3
      %p88 = pnand %p86, %p87
      %p89 = pneg %p88
      // Predicated region
      $region21: #{tpu_custom_call.1} parent=5 // pred_check
        _
      $region22: #{tpu_custom_call.1} parent=5 // pred_check_branch
        %91 = sbr.rel (%p88) target = $region24
      $region23: #{tpu_custom_call.1} parent=5 // pred_region
        %s92 = ssub.s32 %s11, 1
        // Predicated region
        $region25: #{tpu_custom_call.1} parent=23 // pred_check
          %p93 = pneg %p32
        $region26: #{tpu_custom_call.1} parent=23 // pred_check_branch
          %95 = sbr.rel (%p93) target = $region28
        $region27: #{tpu_custom_call.1} parent=23 // pred_region
          %96 = dma.done [#allocation4], 16
        $region28: #{tpu_custom_call.1} parent=23 // pred_fallthru
          _
        %97 = sfence
        %p98 = pneg %p32
        %p99 = pneg %p29
        %p100 = pneg %p58
        %p101 = pneg %p55
        %s102 = sand.u32 %s45, 1
        %s103 = scalar_lea.sflag [#allocation3], %s102
        %s104 = sand.u32 %s45, 1
        %s105 = smul.addr %s104, 256
        %s106 = scalar_lea.vmem [#allocation5], %s105
        %s107 = smul.u32 16, %s16
        %s108 = smul.u32 %s16, 128
        %v109 = vlaneseq
        %v110 = vshrl.u32 %v109, 7
        %v111 = vadd.s32 %v110, 8
        %v112 = vadd.s32 %v110, 16
        %v113 = vadd.s32 %v110, 24
        %v114 = vadd.s32 %v110, 32
        %v115 = vadd.s32 %v110, 40
        %v116 = vadd.s32 %v110, 48
        %v117 = vadd.s32 %v110, 56
        %v118 = vadd.s32 %v110, 64
        %v119 = vadd.s32 %v110, 72
        %v120 = vadd.s32 %v110, 80
        %v121 = vadd.s32 %v110, 88
        %v122 = vadd.s32 %v110, 96
        %v123 = vadd.s32 %v110, 104
        %v124 = vadd.s32 %v110, 112
        %v125 = vadd.s32 %v110, 120
        %v126 = vstv %s108
        %v127 = vadd.s32 %v126, %v110
        %v128 = vadd.s32 %v126, %v111
        %v129 = vadd.s32 %v126, %v112
        %v130 = vadd.s32 %v126, %v113
        %v131 = vadd.s32 %v126, %v114
        %v132 = vadd.s32 %v126, %v115
        %v133 = vadd.s32 %v126, %v116
        %v134 = vadd.s32 %v126, %v117
        %v135 = vadd.s32 %v126, %v118
        %v136 = vadd.s32 %v126, %v119
        %v137 = vadd.s32 %v126, %v120
        %v138 = vadd.s32 %v126, %v121
        %v139 = vadd.s32 %v126, %v122
        %v140 = vadd.s32 %v126, %v123
        %v141 = vadd.s32 %v126, %v124
        %v142 = vadd.s32 %v126, %v125
        %v143 = vand.u32 %v127, 1
        %v144 = vand.u32 %v128, 1
        %v145 = vand.u32 %v129, 1
        %v146 = vand.u32 %v130, 1
        %v147 = vand.u32 %v131, 1
        %v148 = vand.u32 %v132, 1
        %v149 = vand.u32 %v133, 1
        %v150 = vand.u32 %v134, 1
        %v151 = vand.u32 %v135, 1
        %v152 = vand.u32 %v136, 1
        %v153 = vand.u32 %v137, 1
        %v154 = vand.u32 %v138, 1
        %v155 = vand.u32 %v139, 1
        %v156 = vand.u32 %v140, 1
        %v157 = vand.u32 %v141, 1
        %v158 = vand.u32 %v142, 1
        %v159 = vcvt.s32.f32 %v143
        %v160 = vcvt.s32.f32 %v144
        %v161 = vcvt.s32.f32 %v145
        %v162 = vcvt.s32.f32 %v146
        %v163 = vcvt.s32.f32 %v147
        %v164 = vcvt.s32.f32 %v148
        %v165 = vcvt.s32.f32 %v149
        %v166 = vcvt.s32.f32 %v150
        %v167 = vcvt.s32.f32 %v151
        %v168 = vcvt.s32.f32 %v152
        %v169 = vcvt.s32.f32 %v153
        %v170 = vcvt.s32.f32 %v154
        %v171 = vcvt.s32.f32 %v155
        %v172 = vcvt.s32.f32 %v156
        %v173 = vcvt.s32.f32 %v157
        %v174 = vcvt.s32.f32 %v158
        %v175 = vsub.f32 %v159, 0.5
        %v176 = vsub.f32 %v160, 0.5
        %v177 = vsub.f32 %v161, 0.5
        %v178 = vsub.f32 %v162, 0.5
        %v179 = vsub.f32 %v163, 0.5
        %v180 = vsub.f32 %v164, 0.5
        %v181 = vsub.f32 %v165, 0.5
        %v182 = vsub.f32 %v166, 0.5
        %v183 = vsub.f32 %v167, 0.5
        %v184 = vsub.f32 %v168, 0.5
        %v185 = vsub.f32 %v169, 0.5
        %v186 = vsub.f32 %v170, 0.5
        %v187 = vsub.f32 %v171, 0.5
        %v188 = vsub.f32 %v172, 0.5
        %v189 = vsub.f32 %v173, 0.5
        %v190 = vsub.f32 %v174, 0.5
        %s191 = sld [smem:[#allocation2]]
        %v192 = vstv %s191
        %v193 = vmul.f32 %v192, %v175
        %v194 = vmul.f32 %v192, %v176
        %v195 = vmul.f32 %v192, %v177
        %v196 = vmul.f32 %v192, %v178
        %v197 = vmul.f32 %v192, %v179
        %v198 = vmul.f32 %v192, %v180
        %v199 = vmul.f32 %v192, %v181
        %v200 = vmul.f32 %v192, %v182
        %v201 = vmul.f32 %v192, %v183
        %v202 = vmul.f32 %v192, %v184
        %v203 = vmul.f32 %v192, %v185
        %v204 = vmul.f32 %v192, %v186
        %v205 = vmul.f32 %v192, %v187
        %v206 = vmul.f32 %v192, %v188
        %v207 = vmul.f32 %v192, %v189
        %v208 = vmul.f32 %v192, %v190
        %v209 = vshra.s32 %v127, 1
        %v210 = vshra.s32 %v128, 1
        %v211 = vshra.s32 %v129, 1
        %v212 = vshra.s32 %v130, 1
        %v213 = vshra.s32 %v131, 1
        %v214 = vshra.s32 %v132, 1
        %v215 = vshra.s32 %v133, 1
        %v216 = vshra.s32 %v134, 1
        %v217 = vshra.s32 %v135, 1
        %v218 = vshra.s32 %v136, 1
        %v219 = vshra.s32 %v137, 1
        %v220 = vshra.s32 %v138, 1
        %v221 = vshra.s32 %v139, 1
        %v222 = vshra.s32 %v140, 1
        %v223 = vshra.s32 %v141, 1
        %v224 = vshra.s32 %v142, 1
        %v225 = vand.u32 %v209, 1
        %v226 = vand.u32 %v210, 1
        %v227 = vand.u32 %v211, 1
        %v228 = vand.u32 %v212, 1
        %v229 = vand.u32 %v213, 1
        %v230 = vand.u32 %v214, 1
        %v231 = vand.u32 %v215, 1
        %v232 = vand.u32 %v216, 1
        %v233 = vand.u32 %v217, 1
        %v234 = vand.u32 %v218, 1
        %v235 = vand.u32 %v219, 1
        %v236 = vand.u32 %v220, 1
        %v237 = vand.u32 %v221, 1
        %v238 = vand.u32 %v222, 1
        %v239 = vand.u32 %v223, 1
        %v240 = vand.u32 %v224, 1
        %v241 = vcvt.s32.f32 %v225
        %v242 = vcvt.s32.f32 %v226
        %v243 = vcvt.s32.f32 %v227
        %v244 = vcvt.s32.f32 %v228
        %v245 = vcvt.s32.f32 %v229
        %v246 = vcvt.s32.f32 %v230
        %v247 = vcvt.s32.f32 %v231
        %v248 = vcvt.s32.f32 %v232
        %v249 = vcvt.s32.f32 %v233
        %v250 = vcvt.s32.f32 %v234
        %v251 = vcvt.s32.f32 %v235
        %v252 = vcvt.s32.f32 %v236
        %v253 = vcvt.s32.f32 %v237
        %v254 = vcvt.s32.f32 %v238
        %v255 = vcvt.s32.f32 %v239
        %v256 = vcvt.s32.f32 %v240
        %v257 = vsub.f32 %v241, 0.5
        %v258 = vsub.f32 %v242, 0.5
        %v259 = vsub.f32 %v243, 0.5
        %v260 = vsub.f32 %v244, 0.5
        %v261 = vsub.f32 %v245, 0.5
        %v262 = vsub.f32 %v246, 0.5
        %v263 = vsub.f32 %v247, 0.5
        %v264 = vsub.f32 %v248, 0.5
        %v265 = vsub.f32 %v249, 0.5
        %v266 = vsub.f32 %v250, 0.5
        %v267 = vsub.f32 %v251, 0.5
        %v268 = vsub.f32 %v252, 0.5
        %v269 = vsub.f32 %v253, 0.5
        %v270 = vsub.f32 %v254, 0.5
        %v271 = vsub.f32 %v255, 0.5
        %v272 = vsub.f32 %v256, 0.5
        %s273 = sld [smem:[#allocation2 + $0x1]]
        %v274 = vstv %s273
        %v275 = vmul.f32 %v274, %v257
        %v276 = vmul.f32 %v274, %v258
        %v277 = vmul.f32 %v274, %v259
        %v278 = vmul.f32 %v274, %v260
        %v279 = vmul.f32 %v274, %v261
        %v280 = vmul.f32 %v274, %v262
        %v281 = vmul.f32 %v274, %v263
        %v282 = vmul.f32 %v274, %v264
        %v283 = vmul.f32 %v274, %v265
        %v284 = vmul.f32 %v274, %v266
        %v285 = vmul.f32 %v274, %v267
        %v286 = vmul.f32 %v274, %v268
        %v287 = vmul.f32 %v274, %v269
        %v288 = vmul.f32 %v274, %v270
        %v289 = vmul.f32 %v274, %v271
        %v290 = vmul.f32 %v274, %v272
        %v291 = vadd.f32 %v193, %v275
        %v292 = vadd.f32 %v194, %v276
        %v293 = vadd.f32 %v195, %v277
        %v294 = vadd.f32 %v196, %v278
        %v295 = vadd.f32 %v197, %v279
        %v296 = vadd.f32 %v198, %v280
        %v297 = vadd.f32 %v199, %v281
        %v298 = vadd.f32 %v200, %v282
        %v299 = vadd.f32 %v201, %v283
        %v300 = vadd.f32 %v202, %v284
        %v301 = vadd.f32 %v203, %v285
        %v302 = vadd.f32 %v204, %v286
        %v303 = vadd.f32 %v205, %v287
        %v304 = vadd.f32 %v206, %v288
        %v305 = vadd.f32 %v207, %v289
        %v306 = vadd.f32 %v208, %v290
        %v307 = vmul.f32 %v175, %v257
        %v308 = vmul.f32 %v176, %v258
        %v309 = vmul.f32 %v177, %v259
        %v310 = vmul.f32 %v178, %v260
        %v311 = vmul.f32 %v179, %v261
        %v312 = vmul.f32 %v180, %v262
        %v313 = vmul.f32 %v181, %v263
        %v314 = vmul.f32 %v182, %v264
        %v315 = vmul.f32 %v183, %v265
        %v316 = vmul.f32 %v184, %v266
        %v317 = vmul.f32 %v185, %v267
        %v318 = vmul.f32 %v186, %v268
        %v319 = vmul.f32 %v187, %v269
        %v320 = vmul.f32 %v188, %v270
        %v321 = vmul.f32 %v189, %v271
        %v322 = vmul.f32 %v190, %v272
        %v323 = vadd.f32 %v291, %v307
        %v324 = vadd.f32 %v292, %v308
        %v325 = vadd.f32 %v293, %v309
        %v326 = vadd.f32 %v294, %v310
        %v327 = vadd.f32 %v295, %v311
        %v328 = vadd.f32 %v296, %v312
        %v329 = vadd.f32 %v297, %v313
        %v330 = vadd.f32 %v298, %v314
        %v331 = vadd.f32 %v299, %v315
        %v332 = vadd.f32 %v300, %v316
        %v333 = vadd.f32 %v301, %v317
        %v334 = vadd.f32 %v302, %v318
        %v335 = vadd.f32 %v303, %v319
        %v336 = vadd.f32 %v304, %v320
        %v337 = vadd.f32 %v305, %v321
        %v338 = vadd.f32 %v306, %v322
        %v339 = vshra.s32 %v127, 2
        %v340 = vshra.s32 %v128, 2
        %v341 = vshra.s32 %v129, 2
        %v342 = vshra.s32 %v130, 2
        %v343 = vshra.s32 %v131, 2
        %v344 = vshra.s32 %v132, 2
        %v345 = vshra.s32 %v133, 2
        %v346 = vshra.s32 %v134, 2
        %v347 = vshra.s32 %v135, 2
        %v348 = vshra.s32 %v136, 2
        %v349 = vshra.s32 %v137, 2
        %v350 = vshra.s32 %v138, 2
        %v351 = vshra.s32 %v139, 2
        %v352 = vshra.s32 %v140, 2
        %v353 = vshra.s32 %v141, 2
        %v354 = vshra.s32 %v142, 2
        %v355 = vand.u32 %v339, 1
        %v356 = vand.u32 %v340, 1
        %v357 = vand.u32 %v341, 1
        %v358 = vand.u32 %v342, 1
        %v359 = vand.u32 %v343, 1
        %v360 = vand.u32 %v344, 1
        %v361 = vand.u32 %v345, 1
        %v362 = vand.u32 %v346, 1
        %v363 = vand.u32 %v347, 1
        %v364 = vand.u32 %v348, 1
        %v365 = vand.u32 %v349, 1
        %v366 = vand.u32 %v350, 1
        %v367 = vand.u32 %v351, 1
        %v368 = vand.u32 %v352, 1
        %v369 = vand.u32 %v353, 1
        %v370 = vand.u32 %v354, 1
        %v371 = vcvt.s32.f32 %v355
        %v372 = vcvt.s32.f32 %v356
        %v373 = vcvt.s32.f32 %v357
        %v374 = vcvt.s32.f32 %v358
        %v375 = vcvt.s32.f32 %v359
        %v376 = vcvt.s32.f32 %v360
        %v377 = vcvt.s32.f32 %v361
        %v378 = vcvt.s32.f32 %v362
        %v379 = vcvt.s32.f32 %v363
        %v380 = vcvt.s32.f32 %v364
        %v381 = vcvt.s32.f32 %v365
        %v382 = vcvt.s32.f32 %v366
        %v383 = vcvt.s32.f32 %v367
        %v384 = vcvt.s32.f32 %v368
        %v385 = vcvt.s32.f32 %v369
        %v386 = vcvt.s32.f32 %v370
        %v387 = vsub.f32 %v371, 0.5
        %v388 = vsub.f32 %v372, 0.5
        %v389 = vsub.f32 %v373, 0.5
        %v390 = vsub.f32 %v374, 0.5
        %v391 = vsub.f32 %v375, 0.5
        %v392 = vsub.f32 %v376, 0.5
        %v393 = vsub.f32 %v377, 0.5
        %v394 = vsub.f32 %v378, 0.5
        %v395 = vsub.f32 %v379, 0.5
        %v396 = vsub.f32 %v380, 0.5
        %v397 = vsub.f32 %v381, 0.5
        %v398 = vsub.f32 %v382, 0.5
        %v399 = vsub.f32 %v383, 0.5
        %v400 = vsub.f32 %v384, 0.5
        %v401 = vsub.f32 %v385, 0.5
        %v402 = vsub.f32 %v386, 0.5
        %s403 = sld [smem:[#allocation2 + $0x2]]
        %v404 = vstv %s403
        %v405 = vmul.f32 %v404, %v387
        %v406 = vmul.f32 %v404, %v388
        %v407 = vmul.f32 %v404, %v389
        %v408 = vmul.f32 %v404, %v390
        %v409 = vmul.f32 %v404, %v391
        %v410 = vmul.f32 %v404, %v392
        %v411 = vmul.f32 %v404, %v393
        %v412 = vmul.f32 %v404, %v394
        %v413 = vmul.f32 %v404, %v395
        %v414 = vmul.f32 %v404, %v396
        %v415 = vmul.f32 %v404, %v397
        %v416 = vmul.f32 %v404, %v398
        %v417 = vmul.f32 %v404, %v399
        %v418 = vmul.f32 %v404, %v400
        %v419 = vmul.f32 %v404, %v401
        %v420 = vmul.f32 %v404, %v402
        %v421 = vadd.f32 %v323, %v405
        %v422 = vadd.f32 %v324, %v406
        %v423 = vadd.f32 %v325, %v407
        %v424 = vadd.f32 %v326, %v408
        %v425 = vadd.f32 %v327, %v409
        %v426 = vadd.f32 %v328, %v410
        %v427 = vadd.f32 %v329, %v411
        %v428 = vadd.f32 %v330, %v412
        %v429 = vadd.f32 %v331, %v413
        %v430 = vadd.f32 %v332, %v414
        %v431 = vadd.f32 %v333, %v415
        %v432 = vadd.f32 %v334, %v416
        %v433 = vadd.f32 %v335, %v417
        %v434 = vadd.f32 %v336, %v418
        %v435 = vadd.f32 %v337, %v419
        %v436 = vadd.f32 %v338, %v420
        %v437 = vmul.f32 %v257, %v387
        %v438 = vmul.f32 %v258, %v388
        %v439 = vmul.f32 %v259, %v389
        %v440 = vmul.f32 %v260, %v390
        %v441 = vmul.f32 %v261, %v391
        %v442 = vmul.f32 %v262, %v392
        %v443 = vmul.f32 %v263, %v393
        %v444 = vmul.f32 %v264, %v394
        %v445 = vmul.f32 %v265, %v395
        %v446 = vmul.f32 %v266, %v396
        %v447 = vmul.f32 %v267, %v397
        %v448 = vmul.f32 %v268, %v398
        %v449 = vmul.f32 %v269, %v399
        %v450 = vmul.f32 %v270, %v400
        %v451 = vmul.f32 %v271, %v401
        %v452 = vmul.f32 %v272, %v402
        %v453 = vadd.f32 %v421, %v437
        %v454 = vadd.f32 %v422, %v438
        %v455 = vadd.f32 %v423, %v439
        %v456 = vadd.f32 %v424, %v440
        %v457 = vadd.f32 %v425, %v441
        %v458 = vadd.f32 %v426, %v442
        %v459 = vadd.f32 %v427, %v443
        %v460 = vadd.f32 %v428, %v444
        %v461 = vadd.f32 %v429, %v445
        %v462 = vadd.f32 %v430, %v446
        %v463 = vadd.f32 %v431, %v447
        %v464 = vadd.f32 %v432, %v448
        %v465 = vadd.f32 %v433, %v449
        %v466 = vadd.f32 %v434, %v450
        %v467 = vadd.f32 %v435, %v451
        %v468 = vadd.f32 %v436, %v452
        %v469 = vshra.s32 %v127, 3
        %v470 = vshra.s32 %v128, 3
        %v471 = vshra.s32 %v129, 3
        %v472 = vshra.s32 %v130, 3
        %v473 = vshra.s32 %v131, 3
        %v474 = vshra.s32 %v132, 3
        %v475 = vshra.s32 %v133, 3
        %v476 = vshra.s32 %v134, 3
        %v477 = vshra.s32 %v135, 3
        %v478 = vshra.s32 %v136, 3
        %v479 = vshra.s32 %v137, 3
        %v480 = vshra.s32 %v138, 3
        %v481 = vshra.s32 %v139, 3
        %v482 = vshra.s32 %v140, 3
        %v483 = vshra.s32 %v141, 3
        %v484 = vshra.s32 %v142, 3
        %v485 = vand.u32 %v469, 1
        %v486 = vand.u32 %v470, 1
        %v487 = vand.u32 %v471, 1
        %v488 = vand.u32 %v472, 1
        %v489 = vand.u32 %v473, 1
        %v490 = vand.u32 %v474, 1
        %v491 = vand.u32 %v475, 1
        %v492 = vand.u32 %v476, 1
        %v493 = vand.u32 %v477, 1
        %v494 = vand.u32 %v478, 1
        %v495 = vand.u32 %v479, 1
        %v496 = vand.u32 %v480, 1
        %v497 = vand.u32 %v481, 1
        %v498 = vand.u32 %v482, 1
        %v499 = vand.u32 %v483, 1
        %v500 = vand.u32 %v484, 1
        %v501 = vcvt.s32.f32 %v485
        %v502 = vcvt.s32.f32 %v486
        %v503 = vcvt.s32.f32 %v487
        %v504 = vcvt.s32.f32 %v488
        %v505 = vcvt.s32.f32 %v489
        %v506 = vcvt.s32.f32 %v490
        %v507 = vcvt.s32.f32 %v491
        %v508 = vcvt.s32.f32 %v492
        %v509 = vcvt.s32.f32 %v493
        %v510 = vcvt.s32.f32 %v494
        %v511 = vcvt.s32.f32 %v495
        %v512 = vcvt.s32.f32 %v496
        %v513 = vcvt.s32.f32 %v497
        %v514 = vcvt.s32.f32 %v498
        %v515 = vcvt.s32.f32 %v499
        %v516 = vcvt.s32.f32 %v500
        %v517 = vsub.f32 %v501, 0.5
        %v518 = vsub.f32 %v502, 0.5
        %v519 = vsub.f32 %v503, 0.5
        %v520 = vsub.f32 %v504, 0.5
        %v521 = vsub.f32 %v505, 0.5
        %v522 = vsub.f32 %v506, 0.5
        %v523 = vsub.f32 %v507, 0.5
        %v524 = vsub.f32 %v508, 0.5
        %v525 = vsub.f32 %v509, 0.5
        %v526 = vsub.f32 %v510, 0.5
        %v527 = vsub.f32 %v511, 0.5
        %v528 = vsub.f32 %v512, 0.5
        %v529 = vsub.f32 %v513, 0.5
        %v530 = vsub.f32 %v514, 0.5
        %v531 = vsub.f32 %v515, 0.5
        %v532 = vsub.f32 %v516, 0.5
        %s533 = sld [smem:[#allocation2 + $0x3]]
        %v534 = vstv %s533
        %v535 = vmul.f32 %v534, %v517
        %v536 = vmul.f32 %v534, %v518
        %v537 = vmul.f32 %v534, %v519
        %v538 = vmul.f32 %v534, %v520
        %v539 = vmul.f32 %v534, %v521
        %v540 = vmul.f32 %v534, %v522
        %v541 = vmul.f32 %v534, %v523
        %v542 = vmul.f32 %v534, %v524
        %v543 = vmul.f32 %v534, %v525
        %v544 = vmul.f32 %v534, %v526
        %v545 = vmul.f32 %v534, %v527
        %v546 = vmul.f32 %v534, %v528
        %v547 = vmul.f32 %v534, %v529
        %v548 = vmul.f32 %v534, %v530
        %v549 = vmul.f32 %v534, %v531
        %v550 = vmul.f32 %v534, %v532
        %v551 = vadd.f32 %v453, %v535
        %v552 = vadd.f32 %v454, %v536
        %v553 = vadd.f32 %v455, %v537
        %v554 = vadd.f32 %v456, %v538
        %v555 = vadd.f32 %v457, %v539
        %v556 = vadd.f32 %v458, %v540
        %v557 = vadd.f32 %v459, %v541
        %v558 = vadd.f32 %v460, %v542
        %v559 = vadd.f32 %v461, %v543
        %v560 = vadd.f32 %v462, %v544
        %v561 = vadd.f32 %v463, %v545
        %v562 = vadd.f32 %v464, %v546
        %v563 = vadd.f32 %v465, %v547
        %v564 = vadd.f32 %v466, %v548
        %v565 = vadd.f32 %v467, %v549
        %v566 = vadd.f32 %v468, %v550
        %v567 = vmul.f32 %v387, %v517
        %v568 = vmul.f32 %v388, %v518
        %v569 = vmul.f32 %v389, %v519
        %v570 = vmul.f32 %v390, %v520
        %v571 = vmul.f32 %v391, %v521
        %v572 = vmul.f32 %v392, %v522
        %v573 = vmul.f32 %v393, %v523
        %v574 = vmul.f32 %v394, %v524
        %v575 = vmul.f32 %v395, %v525
        %v576 = vmul.f32 %v396, %v526
        %v577 = vmul.f32 %v397, %v527
        %v578 = vmul.f32 %v398, %v528
        %v579 = vmul.f32 %v399, %v529
        %v580 = vmul.f32 %v400, %v530
        %v581 = vmul.f32 %v401, %v531
        %v582 = vmul.f32 %v402, %v532
        %v583 = vadd.f32 %v551, %v567
        %v584 = vadd.f32 %v552, %v568
        %v585 = vadd.f32 %v553, %v569
        %v586 = vadd.f32 %v554, %v570
        %v587 = vadd.f32 %v555, %v571
        %v588 = vadd.f32 %v556, %v572
        %v589 = vadd.f32 %v557, %v573
        %v590 = vadd.f32 %v558, %v574
        %v591 = vadd.f32 %v559, %v575
        %v592 = vadd.f32 %v560, %v576
        %v593 = vadd.f32 %v561, %v577
        %v594 = vadd.f32 %v562, %v578
        %v595 = vadd.f32 %v563, %v579
        %v596 = vadd.f32 %v564, %v580
        %v597 = vadd.f32 %v565, %v581
        %v598 = vadd.f32 %v566, %v582
        %v599 = vshra.s32 %v127, 4
        %v600 = vshra.s32 %v128, 4
        %v601 = vshra.s32 %v129, 4
        %v602 = vshra.s32 %v130, 4
        %v603 = vshra.s32 %v131, 4
        %v604 = vshra.s32 %v132, 4
        %v605 = vshra.s32 %v133, 4
        %v606 = vshra.s32 %v134, 4
        %v607 = vshra.s32 %v135, 4
        %v608 = vshra.s32 %v136, 4
        %v609 = vshra.s32 %v137, 4
        %v610 = vshra.s32 %v138, 4
        %v611 = vshra.s32 %v139, 4
        %v612 = vshra.s32 %v140, 4
        %v613 = vshra.s32 %v141, 4
        %v614 = vshra.s32 %v142, 4
        %v615 = vand.u32 %v599, 1
        %v616 = vand.u32 %v600, 1
        %v617 = vand.u32 %v601, 1
        %v618 = vand.u32 %v602, 1
        %v619 = vand.u32 %v603, 1
        %v620 = vand.u32 %v604, 1
        %v621 = vand.u32 %v605, 1
        %v622 = vand.u32 %v606, 1
        %v623 = vand.u32 %v607, 1
        %v624 = vand.u32 %v608, 1
        %v625 = vand.u32 %v609, 1
        %v626 = vand.u32 %v610, 1
        %v627 = vand.u32 %v611, 1
        %v628 = vand.u32 %v612, 1
        %v629 = vand.u32 %v613, 1
        %v630 = vand.u32 %v614, 1
        %v631 = vcvt.s32.f32 %v615
        %v632 = vcvt.s32.f32 %v616
        %v633 = vcvt.s32.f32 %v617
        %v634 = vcvt.s32.f32 %v618
        %v635 = vcvt.s32.f32 %v619
        %v636 = vcvt.s32.f32 %v620
        %v637 = vcvt.s32.f32 %v621
        %v638 = vcvt.s32.f32 %v622
        %v639 = vcvt.s32.f32 %v623
        %v640 = vcvt.s32.f32 %v624
        %v641 = vcvt.s32.f32 %v625
        %v642 = vcvt.s32.f32 %v626
        %v643 = vcvt.s32.f32 %v627
        %v644 = vcvt.s32.f32 %v628
        %v645 = vcvt.s32.f32 %v629
        %v646 = vcvt.s32.f32 %v630
        %v647 = vsub.f32 %v631, 0.5
        %v648 = vsub.f32 %v632, 0.5
        %v649 = vsub.f32 %v633, 0.5
        %v650 = vsub.f32 %v634, 0.5
        %v651 = vsub.f32 %v635, 0.5
        %v652 = vsub.f32 %v636, 0.5
        %v653 = vsub.f32 %v637, 0.5
        %v654 = vsub.f32 %v638, 0.5
        %v655 = vsub.f32 %v639, 0.5
        %v656 = vsub.f32 %v640, 0.5
        %v657 = vsub.f32 %v641, 0.5
        %v658 = vsub.f32 %v642, 0.5
        %v659 = vsub.f32 %v643, 0.5
        %v660 = vsub.f32 %v644, 0.5
        %v661 = vsub.f32 %v645, 0.5
        %v662 = vsub.f32 %v646, 0.5
        %s663 = sld [smem:[#allocation2 + $0x4]]
        %v664 = vstv %s663
        %v665 = vmul.f32 %v664, %v647
        %v666 = vmul.f32 %v664, %v648
        %v667 = vmul.f32 %v664, %v649
        %v668 = vmul.f32 %v664, %v650
        %v669 = vmul.f32 %v664, %v651
        %v670 = vmul.f32 %v664, %v652
        %v671 = vmul.f32 %v664, %v653
        %v672 = vmul.f32 %v664, %v654
        %v673 = vmul.f32 %v664, %v655
        %v674 = vmul.f32 %v664, %v656
        %v675 = vmul.f32 %v664, %v657
        %v676 = vmul.f32 %v664, %v658
        %v677 = vmul.f32 %v664, %v659
        %v678 = vmul.f32 %v664, %v660
        %v679 = vmul.f32 %v664, %v661
        %v680 = vmul.f32 %v664, %v662
        %v681 = vadd.f32 %v583, %v665
        %v682 = vadd.f32 %v584, %v666
        %v683 = vadd.f32 %v585, %v667
        %v684 = vadd.f32 %v586, %v668
        %v685 = vadd.f32 %v587, %v669
        %v686 = vadd.f32 %v588, %v670
        %v687 = vadd.f32 %v589, %v671
        %v688 = vadd.f32 %v590, %v672
        %v689 = vadd.f32 %v591, %v673
        %v690 = vadd.f32 %v592, %v674
        %v691 = vadd.f32 %v593, %v675
        %v692 = vadd.f32 %v594, %v676
        %v693 = vadd.f32 %v595, %v677
        %v694 = vadd.f32 %v596, %v678
        %v695 = vadd.f32 %v597, %v679
        %v696 = vadd.f32 %v598, %v680
        %v697 = vmul.f32 %v517, %v647
        %v698 = vmul.f32 %v518, %v648
        %v699 = vmul.f32 %v519, %v649
        %v700 = vmul.f32 %v520, %v650
        %v701 = vmul.f32 %v521, %v651
        %v702 = vmul.f32 %v522, %v652
        %v703 = vmul.f32 %v523, %v653
        %v704 = vmul.f32 %v524, %v654
        %v705 = vmul.f32 %v525, %v655
        %v706 = vmul.f32 %v526, %v656
        %v707 = vmul.f32 %v527, %v657
        %v708 = vmul.f32 %v528, %v658
        %v709 = vmul.f32 %v529, %v659
        %v710 = vmul.f32 %v530, %v660
        %v711 = vmul.f32 %v531, %v661
        %v712 = vmul.f32 %v532, %v662
        %v713 = vadd.f32 %v681, %v697
        %v714 = vadd.f32 %v682, %v698
        %v715 = vadd.f32 %v683, %v699
        %v716 = vadd.f32 %v684, %v700
        %v717 = vadd.f32 %v685, %v701
        %v718 = vadd.f32 %v686, %v702
        %v719 = vadd.f32 %v687, %v703
        %v720 = vadd.f32 %v688, %v704
        %v721 = vadd.f32 %v689, %v705
        %v722 = vadd.f32 %v690, %v706
        %v723 = vadd.f32 %v691, %v707
        %v724 = vadd.f32 %v692, %v708
        %v725 = vadd.f32 %v693, %v709
        %v726 = vadd.f32 %v694, %v710
        %v727 = vadd.f32 %v695, %v711
        %v728 = vadd.f32 %v696, %v712
        %v729 = vshra.s32 %v127, 5
        %v730 = vshra.s32 %v128, 5
        %v731 = vshra.s32 %v129, 5
        %v732 = vshra.s32 %v130, 5
        %v733 = vshra.s32 %v131, 5
        %v734 = vshra.s32 %v132, 5
        %v735 = vshra.s32 %v133, 5
        %v736 = vshra.s32 %v134, 5
        %v737 = vshra.s32 %v135, 5
        %v738 = vshra.s32 %v136, 5
        %v739 = vshra.s32 %v137, 5
        %v740 = vshra.s32 %v138, 5
        %v741 = vshra.s32 %v139, 5
        %v742 = vshra.s32 %v140, 5
        %v743 = vshra.s32 %v141, 5
        %v744 = vshra.s32 %v142, 5
        %v745 = vand.u32 %v729, 1
        %v746 = vand.u32 %v730, 1
        %v747 = vand.u32 %v731, 1
        %v748 = vand.u32 %v732, 1
        %v749 = vand.u32 %v733, 1
        %v750 = vand.u32 %v734, 1
        %v751 = vand.u32 %v735, 1
        %v752 = vand.u32 %v736, 1
        %v753 = vand.u32 %v737, 1
        %v754 = vand.u32 %v738, 1
        %v755 = vand.u32 %v739, 1
        %v756 = vand.u32 %v740, 1
        %v757 = vand.u32 %v741, 1
        %v758 = vand.u32 %v742, 1
        %v759 = vand.u32 %v743, 1
        %v760 = vand.u32 %v744, 1
        %v761 = vcvt.s32.f32 %v745
        %v762 = vcvt.s32.f32 %v746
        %v763 = vcvt.s32.f32 %v747
        %v764 = vcvt.s32.f32 %v748
        %v765 = vcvt.s32.f32 %v749
        %v766 = vcvt.s32.f32 %v750
        %v767 = vcvt.s32.f32 %v751
        %v768 = vcvt.s32.f32 %v752
        %v769 = vcvt.s32.f32 %v753
        %v770 = vcvt.s32.f32 %v754
        %v771 = vcvt.s32.f32 %v755
        %v772 = vcvt.s32.f32 %v756
        %v773 = vcvt.s32.f32 %v757
        %v774 = vcvt.s32.f32 %v758
        %v775 = vcvt.s32.f32 %v759
        %v776 = vcvt.s32.f32 %v760
        %v777 = vsub.f32 %v761, 0.5
        %v778 = vsub.f32 %v762, 0.5
        %v779 = vsub.f32 %v763, 0.5
        %v780 = vsub.f32 %v764, 0.5
        %v781 = vsub.f32 %v765, 0.5
        %v782 = vsub.f32 %v766, 0.5
        %v783 = vsub.f32 %v767, 0.5
        %v784 = vsub.f32 %v768, 0.5
        %v785 = vsub.f32 %v769, 0.5
        %v786 = vsub.f32 %v770, 0.5
        %v787 = vsub.f32 %v771, 0.5
        %v788 = vsub.f32 %v772, 0.5
        %v789 = vsub.f32 %v773, 0.5
        %v790 = vsub.f32 %v774, 0.5
        %v791 = vsub.f32 %v775, 0.5
        %v792 = vsub.f32 %v776, 0.5
        %s793 = sld [smem:[#allocation2 + $0x5]]
        %v794 = vstv %s793
        %v795 = vmul.f32 %v794, %v777
        %v796 = vmul.f32 %v794, %v778
        %v797 = vmul.f32 %v794, %v779
        %v798 = vmul.f32 %v794, %v780
        %v799 = vmul.f32 %v794, %v781
        %v800 = vmul.f32 %v794, %v782
        %v801 = vmul.f32 %v794, %v783
        %v802 = vmul.f32 %v794, %v784
        %v803 = vmul.f32 %v794, %v785
        %v804 = vmul.f32 %v794, %v786
        %v805 = vmul.f32 %v794, %v787
        %v806 = vmul.f32 %v794, %v788
        %v807 = vmul.f32 %v794, %v789
        %v808 = vmul.f32 %v794, %v790
        %v809 = vmul.f32 %v794, %v791
        %v810 = vmul.f32 %v794, %v792
        %v811 = vadd.f32 %v713, %v795
        %v812 = vadd.f32 %v714, %v796
        %v813 = vadd.f32 %v715, %v797
        %v814 = vadd.f32 %v716, %v798
        %v815 = vadd.f32 %v717, %v799
        %v816 = vadd.f32 %v718, %v800
        %v817 = vadd.f32 %v719, %v801
        %v818 = vadd.f32 %v720, %v802
        %v819 = vadd.f32 %v721, %v803
        %v820 = vadd.f32 %v722, %v804
        %v821 = vadd.f32 %v723, %v805
        %v822 = vadd.f32 %v724, %v806
        %v823 = vadd.f32 %v725, %v807
        %v824 = vadd.f32 %v726, %v808
        %v825 = vadd.f32 %v727, %v809
        %v826 = vadd.f32 %v728, %v810
        %v827 = vmul.f32 %v647, %v777
        %v828 = vmul.f32 %v648, %v778
        %v829 = vmul.f32 %v649, %v779
        %v830 = vmul.f32 %v650, %v780
        %v831 = vmul.f32 %v651, %v781
        %v832 = vmul.f32 %v652, %v782
        %v833 = vmul.f32 %v653, %v783
        %v834 = vmul.f32 %v654, %v784
        %v835 = vmul.f32 %v655, %v785
        %v836 = vmul.f32 %v656, %v786
        %v837 = vmul.f32 %v657, %v787
        %v838 = vmul.f32 %v658, %v788
        %v839 = vmul.f32 %v659, %v789
        %v840 = vmul.f32 %v660, %v790
        %v841 = vmul.f32 %v661, %v791
        %v842 = vmul.f32 %v662, %v792
        %v843 = vadd.f32 %v811, %v827
        %v844 = vadd.f32 %v812, %v828
        %v845 = vadd.f32 %v813, %v829
        %v846 = vadd.f32 %v814, %v830
        %v847 = vadd.f32 %v815, %v831
        %v848 = vadd.f32 %v816, %v832
        %v849 = vadd.f32 %v817, %v833
        %v850 = vadd.f32 %v818, %v834
        %v851 = vadd.f32 %v819, %v835
        %v852 = vadd.f32 %v820, %v836
        %v853 = vadd.f32 %v821, %v837
        %v854 = vadd.f32 %v822, %v838
        %v855 = vadd.f32 %v823, %v839
        %v856 = vadd.f32 %v824, %v840
        %v857 = vadd.f32 %v825, %v841
        %v858 = vadd.f32 %v826, %v842
        %v859 = vshra.s32 %v127, 6
        %v860 = vshra.s32 %v128, 6
        %v861 = vshra.s32 %v129, 6
        %v862 = vshra.s32 %v130, 6
        %v863 = vshra.s32 %v131, 6
        %v864 = vshra.s32 %v132, 6
        %v865 = vshra.s32 %v133, 6
        %v866 = vshra.s32 %v134, 6
        %v867 = vshra.s32 %v135, 6
        %v868 = vshra.s32 %v136, 6
        %v869 = vshra.s32 %v137, 6
        %v870 = vshra.s32 %v138, 6
        %v871 = vshra.s32 %v139, 6
        %v872 = vshra.s32 %v140, 6
        %v873 = vshra.s32 %v141, 6
        %v874 = vshra.s32 %v142, 6
        %v875 = vand.u32 %v859, 1
        %v876 = vand.u32 %v860, 1
        %v877 = vand.u32 %v861, 1
        %v878 = vand.u32 %v862, 1
        %v879 = vand.u32 %v863, 1
        %v880 = vand.u32 %v864, 1
        %v881 = vand.u32 %v865, 1
        %v882 = vand.u32 %v866, 1
        %v883 = vand.u32 %v867, 1
        %v884 = vand.u32 %v868, 1
        %v885 = vand.u32 %v869, 1
        %v886 = vand.u32 %v870, 1
        %v887 = vand.u32 %v871, 1
        %v888 = vand.u32 %v872, 1
        %v889 = vand.u32 %v873, 1
        %v890 = vand.u32 %v874, 1
        %v891 = vcvt.s32.f32 %v875
        %v892 = vcvt.s32.f32 %v876
        %v893 = vcvt.s32.f32 %v877
        %v894 = vcvt.s32.f32 %v878
        %v895 = vcvt.s32.f32 %v879
        %v896 = vcvt.s32.f32 %v880
        %v897 = vcvt.s32.f32 %v881
        %v898 = vcvt.s32.f32 %v882
        %v899 = vcvt.s32.f32 %v883
        %v900 = vcvt.s32.f32 %v884
        %v901 = vcvt.s32.f32 %v885
        %v902 = vcvt.s32.f32 %v886
        %v903 = vcvt.s32.f32 %v887
        %v904 = vcvt.s32.f32 %v888
        %v905 = vcvt.s32.f32 %v889
        %v906 = vcvt.s32.f32 %v890
        %v907 = vsub.f32 %v891, 0.5
        %v908 = vsub.f32 %v892, 0.5
        %v909 = vsub.f32 %v893, 0.5
        %v910 = vsub.f32 %v894, 0.5
        %v911 = vsub.f32 %v895, 0.5
        %v912 = vsub.f32 %v896, 0.5
        %v913 = vsub.f32 %v897, 0.5
        %v914 = vsub.f32 %v898, 0.5
        %v915 = vsub.f32 %v899, 0.5
        %v916 = vsub.f32 %v900, 0.5
        %v917 = vsub.f32 %v901, 0.5
        %v918 = vsub.f32 %v902, 0.5
        %v919 = vsub.f32 %v903, 0.5
        %v920 = vsub.f32 %v904, 0.5
        %v921 = vsub.f32 %v905, 0.5
        %v922 = vsub.f32 %v906, 0.5
        %s923 = sld [smem:[#allocation2 + $0x6]]
        %v924 = vstv %s923
        %v925 = vmul.f32 %v924, %v907
        %v926 = vmul.f32 %v924, %v908
        %v927 = vmul.f32 %v924, %v909
        %v928 = vmul.f32 %v924, %v910
        %v929 = vmul.f32 %v924, %v911
        %v930 = vmul.f32 %v924, %v912
        %v931 = vmul.f32 %v924, %v913
        %v932 = vmul.f32 %v924, %v914
        %v933 = vmul.f32 %v924, %v915
        %v934 = vmul.f32 %v924, %v916
        %v935 = vmul.f32 %v924, %v917
        %v936 = vmul.f32 %v924, %v918
        %v937 = vmul.f32 %v924, %v919
        %v938 = vmul.f32 %v924, %v920
        %v939 = vmul.f32 %v924, %v921
        %v940 = vmul.f32 %v924, %v922
        %v941 = vadd.f32 %v843, %v925
        %v942 = vadd.f32 %v844, %v926
        %v943 = vadd.f32 %v845, %v927
        %v944 = vadd.f32 %v846, %v928
        %v945 = vadd.f32 %v847, %v929
        %v946 = vadd.f32 %v848, %v930
        %v947 = vadd.f32 %v849, %v931
        %v948 = vadd.f32 %v850, %v932
        %v949 = vadd.f32 %v851, %v933
        %v950 = vadd.f32 %v852, %v934
        %v951 = vadd.f32 %v853, %v935
        %v952 = vadd.f32 %v854, %v936
        %v953 = vadd.f32 %v855, %v937
        %v954 = vadd.f32 %v856, %v938
        %v955 = vadd.f32 %v857, %v939
        %v956 = vadd.f32 %v858, %v940
        %v957 = vmul.f32 %v777, %v907
        %v958 = vmul.f32 %v778, %v908
        %v959 = vmul.f32 %v779, %v909
        %v960 = vmul.f32 %v780, %v910
        %v961 = vmul.f32 %v781, %v911
        %v962 = vmul.f32 %v782, %v912
        %v963 = vmul.f32 %v783, %v913
        %v964 = vmul.f32 %v784, %v914
        %v965 = vmul.f32 %v785, %v915
        %v966 = vmul.f32 %v786, %v916
        %v967 = vmul.f32 %v787, %v917
        %v968 = vmul.f32 %v788, %v918
        %v969 = vmul.f32 %v789, %v919
        %v970 = vmul.f32 %v790, %v920
        %v971 = vmul.f32 %v791, %v921
        %v972 = vmul.f32 %v792, %v922
        %v973 = vadd.f32 %v941, %v957
        %v974 = vadd.f32 %v942, %v958
        %v975 = vadd.f32 %v943, %v959
        %v976 = vadd.f32 %v944, %v960
        %v977 = vadd.f32 %v945, %v961
        %v978 = vadd.f32 %v946, %v962
        %v979 = vadd.f32 %v947, %v963
        %v980 = vadd.f32 %v948, %v964
        %v981 = vadd.f32 %v949, %v965
        %v982 = vadd.f32 %v950, %v966
        %v983 = vadd.f32 %v951, %v967
        %v984 = vadd.f32 %v952, %v968
        %v985 = vadd.f32 %v953, %v969
        %v986 = vadd.f32 %v954, %v970
        %v987 = vadd.f32 %v955, %v971
        %v988 = vadd.f32 %v956, %v972
        %v989 = vshra.s32 %v127, 7
        %v990 = vshra.s32 %v128, 7
        %v991 = vshra.s32 %v129, 7
        %v992 = vshra.s32 %v130, 7
        %v993 = vshra.s32 %v131, 7
        %v994 = vshra.s32 %v132, 7
        %v995 = vshra.s32 %v133, 7
        %v996 = vshra.s32 %v134, 7
        %v997 = vshra.s32 %v135, 7
        %v998 = vshra.s32 %v136, 7
        %v999 = vshra.s32 %v137, 7
        %v1000 = vshra.s32 %v138, 7
        %v1001 = vshra.s32 %v139, 7
        %v1002 = vshra.s32 %v140, 7
        %v1003 = vshra.s32 %v141, 7
        %v1004 = vshra.s32 %v142, 7
        %v1005 = vand.u32 %v989, 1
        %v1006 = vand.u32 %v990, 1
        %v1007 = vand.u32 %v991, 1
        %v1008 = vand.u32 %v992, 1
        %v1009 = vand.u32 %v993, 1
        %v1010 = vand.u32 %v994, 1
        %v1011 = vand.u32 %v995, 1
        %v1012 = vand.u32 %v996, 1
        %v1013 = vand.u32 %v997, 1
        %v1014 = vand.u32 %v998, 1
        %v1015 = vand.u32 %v999, 1
        %v1016 = vand.u32 %v1000, 1
        %v1017 = vand.u32 %v1001, 1
        %v1018 = vand.u32 %v1002, 1
        %v1019 = vand.u32 %v1003, 1
        %v1020 = vand.u32 %v1004, 1
        %v1021 = vcvt.s32.f32 %v1005
        %v1022 = vcvt.s32.f32 %v1006
        %v1023 = vcvt.s32.f32 %v1007
        %v1024 = vcvt.s32.f32 %v1008
        %v1025 = vcvt.s32.f32 %v1009
        %v1026 = vcvt.s32.f32 %v1010
        %v1027 = vcvt.s32.f32 %v1011
        %v1028 = vcvt.s32.f32 %v1012
        %v1029 = vcvt.s32.f32 %v1013
        %v1030 = vcvt.s32.f32 %v1014
        %v1031 = vcvt.s32.f32 %v1015
        %v1032 = vcvt.s32.f32 %v1016
        %v1033 = vcvt.s32.f32 %v1017
        %v1034 = vcvt.s32.f32 %v1018
        %v1035 = vcvt.s32.f32 %v1019
        %v1036 = vcvt.s32.f32 %v1020
        %v1037 = vsub.f32 %v1021, 0.5
        %v1038 = vsub.f32 %v1022, 0.5
        %v1039 = vsub.f32 %v1023, 0.5
        %v1040 = vsub.f32 %v1024, 0.5
        %v1041 = vsub.f32 %v1025, 0.5
        %v1042 = vsub.f32 %v1026, 0.5
        %v1043 = vsub.f32 %v1027, 0.5
        %v1044 = vsub.f32 %v1028, 0.5
        %v1045 = vsub.f32 %v1029, 0.5
        %v1046 = vsub.f32 %v1030, 0.5
        %v1047 = vsub.f32 %v1031, 0.5
        %v1048 = vsub.f32 %v1032, 0.5
        %v1049 = vsub.f32 %v1033, 0.5
        %v1050 = vsub.f32 %v1034, 0.5
        %v1051 = vsub.f32 %v1035, 0.5
        %v1052 = vsub.f32 %v1036, 0.5
        %s1053 = sld [smem:[#allocation2 + $0x7]]
        %v1054 = vstv %s1053
        %v1055 = vmul.f32 %v1054, %v1037
        %v1056 = vmul.f32 %v1054, %v1038
        %v1057 = vmul.f32 %v1054, %v1039
        %v1058 = vmul.f32 %v1054, %v1040
        %v1059 = vmul.f32 %v1054, %v1041
        %v1060 = vmul.f32 %v1054, %v1042
        %v1061 = vmul.f32 %v1054, %v1043
        %v1062 = vmul.f32 %v1054, %v1044
        %v1063 = vmul.f32 %v1054, %v1045
        %v1064 = vmul.f32 %v1054, %v1046
        %v1065 = vmul.f32 %v1054, %v1047
        %v1066 = vmul.f32 %v1054, %v1048
        %v1067 = vmul.f32 %v1054, %v1049
        %v1068 = vmul.f32 %v1054, %v1050
        %v1069 = vmul.f32 %v1054, %v1051
        %v1070 = vmul.f32 %v1054, %v1052
        %v1071 = vadd.f32 %v973, %v1055
        %v1072 = vadd.f32 %v974, %v1056
        %v1073 = vadd.f32 %v975, %v1057
        %v1074 = vadd.f32 %v976, %v1058
        %v1075 = vadd.f32 %v977, %v1059
        %v1076 = vadd.f32 %v978, %v1060
        %v1077 = vadd.f32 %v979, %v1061
        %v1078 = vadd.f32 %v980, %v1062
        %v1079 = vadd.f32 %v981, %v1063
        %v1080 = vadd.f32 %v982, %v1064
        %v1081 = vadd.f32 %v983, %v1065
        %v1082 = vadd.f32 %v984, %v1066
        %v1083 = vadd.f32 %v985, %v1067
        %v1084 = vadd.f32 %v986, %v1068
        %v1085 = vadd.f32 %v987, %v1069
        %v1086 = vadd.f32 %v988, %v1070
        %v1087 = vmul.f32 %v907, %v1037
        %v1088 = vmul.f32 %v908, %v1038
        %v1089 = vmul.f32 %v909, %v1039
        %v1090 = vmul.f32 %v910, %v1040
        %v1091 = vmul.f32 %v911, %v1041
        %v1092 = vmul.f32 %v912, %v1042
        %v1093 = vmul.f32 %v913, %v1043
        %v1094 = vmul.f32 %v914, %v1044
        %v1095 = vmul.f32 %v915, %v1045
        %v1096 = vmul.f32 %v916, %v1046
        %v1097 = vmul.f32 %v917, %v1047
        %v1098 = vmul.f32 %v918, %v1048
        %v1099 = vmul.f32 %v919, %v1049
        %v1100 = vmul.f32 %v920, %v1050
        %v1101 = vmul.f32 %v921, %v1051
        %v1102 = vmul.f32 %v922, %v1052
        %v1103 = vadd.f32 %v1071, %v1087
        %v1104 = vadd.f32 %v1072, %v1088
        %v1105 = vadd.f32 %v1073, %v1089
        %v1106 = vadd.f32 %v1074, %v1090
        %v1107 = vadd.f32 %v1075, %v1091
        %v1108 = vadd.f32 %v1076, %v1092
        %v1109 = vadd.f32 %v1077, %v1093
        %v1110 = vadd.f32 %v1078, %v1094
        %v1111 = vadd.f32 %v1079, %v1095
        %v1112 = vadd.f32 %v1080, %v1096
        %v1113 = vadd.f32 %v1081, %v1097
        %v1114 = vadd.f32 %v1082, %v1098
        %v1115 = vadd.f32 %v1083, %v1099
        %v1116 = vadd.f32 %v1084, %v1100
        %v1117 = vadd.f32 %v1085, %v1101
        %v1118 = vadd.f32 %v1086, %v1102
        %v1119 = vxor.u32 %v127, %v209
        %v1120 = vxor.u32 %v128, %v210
        %v1121 = vxor.u32 %v129, %v211
        %v1122 = vxor.u32 %v130, %v212
        %v1123 = vxor.u32 %v131, %v213
        %v1124 = vxor.u32 %v132, %v214
        %v1125 = vxor.u32 %v133, %v215
        %v1126 = vxor.u32 %v134, %v216
        %v1127 = vxor.u32 %v135, %v217
        %v1128 = vxor.u32 %v136, %v218
        %v1129 = vxor.u32 %v137, %v219
        %v1130 = vxor.u32 %v138, %v220
        %v1131 = vxor.u32 %v139, %v221
        %v1132 = vxor.u32 %v140, %v222
        %v1133 = vxor.u32 %v141, %v223
        %v1134 = vxor.u32 %v142, %v224
        %v1135 = vlaneseq
        %v1136 = vand.u32 %v1135, 127
        %v1137 = vadd.s32 %v1136, 128
        %v1138 = vxor.u32 %v127, %v1136
        %v1139 = vxor.u32 %v127, %v1137
        %v1140 = vxor.u32 %v128, %v1136
        %v1141 = vxor.u32 %v128, %v1137
        %v1142 = vxor.u32 %v129, %v1136
        %v1143 = vxor.u32 %v129, %v1137
        %v1144 = vxor.u32 %v130, %v1136
        %v1145 = vxor.u32 %v130, %v1137
        %v1146 = vxor.u32 %v131, %v1136
        %v1147 = vxor.u32 %v131, %v1137
        %v1148 = vxor.u32 %v132, %v1136
        %v1149 = vxor.u32 %v132, %v1137
        %v1150 = vxor.u32 %v133, %v1136
        %v1151 = vxor.u32 %v133, %v1137
        %v1152 = vxor.u32 %v134, %v1136
        %v1153 = vxor.u32 %v134, %v1137
        %v1154 = vxor.u32 %v135, %v1136
        %v1155 = vxor.u32 %v135, %v1137
        %v1156 = vxor.u32 %v136, %v1136
        %v1157 = vxor.u32 %v136, %v1137
        %v1158 = vxor.u32 %v137, %v1136
        %v1159 = vxor.u32 %v137, %v1137
        %v1160 = vxor.u32 %v138, %v1136
        %v1161 = vxor.u32 %v138, %v1137
        %v1162 = vxor.u32 %v139, %v1136
        %v1163 = vxor.u32 %v139, %v1137
        %v1164 = vxor.u32 %v140, %v1136
        %v1165 = vxor.u32 %v140, %v1137
        %v1166 = vxor.u32 %v141, %v1136
        %v1167 = vxor.u32 %v141, %v1137
        %v1168 = vxor.u32 %v142, %v1136
        %v1169 = vxor.u32 %v142, %v1137
        %v1170 = vsub.s32 0, %v1138
        %v1171 = vsub.s32 0, %v1139
        %v1172 = vsub.s32 0, %v1140
        %v1173 = vsub.s32 0, %v1141
        %v1174 = vsub.s32 0, %v1142
        %v1175 = vsub.s32 0, %v1143
        %v1176 = vsub.s32 0, %v1144
        %v1177 = vsub.s32 0, %v1145
        %v1178 = vsub.s32 0, %v1146
        %v1179 = vsub.s32 0, %v1147
        %v1180 = vsub.s32 0, %v1148
        %v1181 = vsub.s32 0, %v1149
        %v1182 = vsub.s32 0, %v1150
        %v1183 = vsub.s32 0, %v1151
        %v1184 = vsub.s32 0, %v1152
        %v1185 = vsub.s32 0, %v1153
        %v1186 = vsub.s32 0, %v1154
        %v1187 = vsub.s32 0, %v1155
        %v1188 = vsub.s32 0, %v1156
        %v1189 = vsub.s32 0, %v1157
        %v1190 = vsub.s32 0, %v1158
        %v1191 = vsub.s32 0, %v1159
        %v1192 = vsub.s32 0, %v1160
        %v1193 = vsub.s32 0, %v1161
        %v1194 = vsub.s32 0, %v1162
        %v1195 = vsub.s32 0, %v1163
        %v1196 = vsub.s32 0, %v1164
        %v1197 = vsub.s32 0, %v1165
        %v1198 = vsub.s32 0, %v1166
        %v1199 = vsub.s32 0, %v1167
        %v1200 = vsub.s32 0, %v1168
        %v1201 = vsub.s32 0, %v1169
        %v1202 = vand.u32 %v1138, %v1170
        %v1203 = vand.u32 %v1139, %v1171
        %v1204 = vand.u32 %v1140, %v1172
        %v1205 = vand.u32 %v1141, %v1173
        %v1206 = vand.u32 %v1142, %v1174
        %v1207 = vand.u32 %v1143, %v1175
        %v1208 = vand.u32 %v1144, %v1176
        %v1209 = vand.u32 %v1145, %v1177
        %v1210 = vand.u32 %v1146, %v1178
        %v1211 = vand.u32 %v1147, %v1179
        %v1212 = vand.u32 %v1148, %v1180
        %v1213 = vand.u32 %v1149, %v1181
        %v1214 = vand.u32 %v1150, %v1182
        %v1215 = vand.u32 %v1151, %v1183
        %v1216 = vand.u32 %v1152, %v1184
        %v1217 = vand.u32 %v1153, %v1185
        %v1218 = vand.u32 %v1154, %v1186
        %v1219 = vand.u32 %v1155, %v1187
        %v1220 = vand.u32 %v1156, %v1188
        %v1221 = vand.u32 %v1157, %v1189
        %v1222 = vand.u32 %v1158, %v1190
        %v1223 = vand.u32 %v1159, %v1191
        %v1224 = vand.u32 %v1160, %v1192
        %v1225 = vand.u32 %v1161, %v1193
        %v1226 = vand.u32 %v1162, %v1194
        %v1227 = vand.u32 %v1163, %v1195
        %v1228 = vand.u32 %v1164, %v1196
        %v1229 = vand.u32 %v1165, %v1197
        %v1230 = vand.u32 %v1166, %v1198
        %v1231 = vand.u32 %v1167, %v1199
        %v1232 = vand.u32 %v1168, %v1200
        %v1233 = vand.u32 %v1169, %v1201
        %v1234 = vshll.u32 %v1202, 1
        %v1235 = vshll.u32 %v1203, 1
        %v1236 = vshll.u32 %v1204, 1
        %v1237 = vshll.u32 %v1205, 1
        %v1238 = vshll.u32 %v1206, 1
        %v1239 = vshll.u32 %v1207, 1
        %v1240 = vshll.u32 %v1208, 1
        %v1241 = vshll.u32 %v1209, 1
        %v1242 = vshll.u32 %v1210, 1
        %v1243 = vshll.u32 %v1211, 1
        %v1244 = vshll.u32 %v1212, 1
        %v1245 = vshll.u32 %v1213, 1
        %v1246 = vshll.u32 %v1214, 1
        %v1247 = vshll.u32 %v1215, 1
        %v1248 = vshll.u32 %v1216, 1
        %v1249 = vshll.u32 %v1217, 1
        %v1250 = vshll.u32 %v1218, 1
        %v1251 = vshll.u32 %v1219, 1
        %v1252 = vshll.u32 %v1220, 1
        %v1253 = vshll.u32 %v1221, 1
        %v1254 = vshll.u32 %v1222, 1
        %v1255 = vshll.u32 %v1223, 1
        %v1256 = vshll.u32 %v1224, 1
        %v1257 = vshll.u32 %v1225, 1
        %v1258 = vshll.u32 %v1226, 1
        %v1259 = vshll.u32 %v1227, 1
        %v1260 = vshll.u32 %v1228, 1
        %v1261 = vshll.u32 %v1229, 1
        %v1262 = vshll.u32 %v1230, 1
        %v1263 = vshll.u32 %v1231, 1
        %v1264 = vshll.u32 %v1232, 1
        %v1265 = vshll.u32 %v1233, 1
        %v1266 = vor.u32 %v1234, %v1202
        %v1267 = vor.u32 %v1235, %v1203
        %v1268 = vor.u32 %v1236, %v1204
        %v1269 = vor.u32 %v1237, %v1205
        %v1270 = vor.u32 %v1238, %v1206
        %v1271 = vor.u32 %v1239, %v1207
        %v1272 = vor.u32 %v1240, %v1208
        %v1273 = vor.u32 %v1241, %v1209
        %v1274 = vor.u32 %v1242, %v1210
        %v1275 = vor.u32 %v1243, %v1211
        %v1276 = vor.u32 %v1244, %v1212
        %v1277 = vor.u32 %v1245, %v1213
        %v1278 = vor.u32 %v1246, %v1214
        %v1279 = vor.u32 %v1247, %v1215
        %v1280 = vor.u32 %v1248, %v1216
        %v1281 = vor.u32 %v1249, %v1217
        %v1282 = vor.u32 %v1250, %v1218
        %v1283 = vor.u32 %v1251, %v1219
        %v1284 = vor.u32 %v1252, %v1220
        %v1285 = vor.u32 %v1253, %v1221
        %v1286 = vor.u32 %v1254, %v1222
        %v1287 = vor.u32 %v1255, %v1223
        %v1288 = vor.u32 %v1256, %v1224
        %v1289 = vor.u32 %v1257, %v1225
        %v1290 = vor.u32 %v1258, %v1226
        %v1291 = vor.u32 %v1259, %v1227
        %v1292 = vor.u32 %v1260, %v1228
        %v1293 = vor.u32 %v1261, %v1229
        %v1294 = vor.u32 %v1262, %v1230
        %v1295 = vor.u32 %v1263, %v1231
        %v1296 = vor.u32 %v1264, %v1232
        %v1297 = vor.u32 %v1265, %v1233
        %vm1298 = vcmp.eq.s32.totalorder %v1138, %v1266
        %vm1299 = vcmp.eq.s32.totalorder %v1139, %v1267
        %vm1300 = vcmp.eq.s32.totalorder %v1140, %v1268
        %vm1301 = vcmp.eq.s32.totalorder %v1141, %v1269
        %vm1302 = vcmp.eq.s32.totalorder %v1142, %v1270
        %vm1303 = vcmp.eq.s32.totalorder %v1143, %v1271
        %vm1304 = vcmp.eq.s32.totalorder %v1144, %v1272
        %vm1305 = vcmp.eq.s32.totalorder %v1145, %v1273
        %vm1306 = vcmp.eq.s32.totalorder %v1146, %v1274
        %vm1307 = vcmp.eq.s32.totalorder %v1147, %v1275
        %vm1308 = vcmp.eq.s32.totalorder %v1148, %v1276
        %vm1309 = vcmp.eq.s32.totalorder %v1149, %v1277
        %vm1310 = vcmp.eq.s32.totalorder %v1150, %v1278
        %vm1311 = vcmp.eq.s32.totalorder %v1151, %v1279
        %vm1312 = vcmp.eq.s32.totalorder %v1152, %v1280
        %vm1313 = vcmp.eq.s32.totalorder %v1153, %v1281
        %vm1314 = vcmp.eq.s32.totalorder %v1154, %v1282
        %vm1315 = vcmp.eq.s32.totalorder %v1155, %v1283
        %vm1316 = vcmp.eq.s32.totalorder %v1156, %v1284
        %vm1317 = vcmp.eq.s32.totalorder %v1157, %v1285
        %vm1318 = vcmp.eq.s32.totalorder %v1158, %v1286
        %vm1319 = vcmp.eq.s32.totalorder %v1159, %v1287
        %vm1320 = vcmp.eq.s32.totalorder %v1160, %v1288
        %vm1321 = vcmp.eq.s32.totalorder %v1161, %v1289
        %vm1322 = vcmp.eq.s32.totalorder %v1162, %v1290
        %vm1323 = vcmp.eq.s32.totalorder %v1163, %v1291
        %vm1324 = vcmp.eq.s32.totalorder %v1164, %v1292
        %vm1325 = vcmp.eq.s32.totalorder %v1165, %v1293
        %vm1326 = vcmp.eq.s32.totalorder %v1166, %v1294
        %vm1327 = vcmp.eq.s32.totalorder %v1167, %v1295
        %vm1328 = vcmp.eq.s32.totalorder %v1168, %v1296
        %vm1329 = vcmp.eq.s32.totalorder %v1169, %v1297
        %v1330 = vand.u32 %v1119, %v1202
        %v1331 = vand.u32 %v1119, %v1203
        %v1332 = vand.u32 %v1120, %v1204
        %v1333 = vand.u32 %v1120, %v1205
        %v1334 = vand.u32 %v1121, %v1206
        %v1335 = vand.u32 %v1121, %v1207
        %v1336 = vand.u32 %v1122, %v1208
        %v1337 = vand.u32 %v1122, %v1209
        %v1338 = vand.u32 %v1123, %v1210
        %v1339 = vand.u32 %v1123, %v1211
        %v1340 = vand.u32 %v1124, %v1212
        %v1341 = vand.u32 %v1124, %v1213
        %v1342 = vand.u32 %v1125, %v1214
        %v1343 = vand.u32 %v1125, %v1215
        %v1344 = vand.u32 %v1126, %v1216
        %v1345 = vand.u32 %v1126, %v1217
        %v1346 = vand.u32 %v1127, %v1218
        %v1347 = vand.u32 %v1127, %v1219
        %v1348 = vand.u32 %v1128, %v1220
        %v1349 = vand.u32 %v1128, %v1221
        %v1350 = vand.u32 %v1129, %v1222
        %v1351 = vand.u32 %v1129, %v1223
        %v1352 = vand.u32 %v1130, %v1224
        %v1353 = vand.u32 %v1130, %v1225
        %v1354 = vand.u32 %v1131, %v1226
        %v1355 = vand.u32 %v1131, %v1227
        %v1356 = vand.u32 %v1132, %v1228
        %v1357 = vand.u32 %v1132, %v1229
        %v1358 = vand.u32 %v1133, %v1230
        %v1359 = vand.u32 %v1133, %v1231
        %v1360 = vand.u32 %v1134, %v1232
        %v1361 = vand.u32 %v1134, %v1233
        %vm1362 = vcmp.ne.s32.totalorder %v1330, 0
        %vm1363 = vcmp.ne.s32.totalorder %v1331, 0
        %vm1364 = vcmp.ne.s32.totalorder %v1332, 0
        %vm1365 = vcmp.ne.s32.totalorder %v1333, 0
        %vm1366 = vcmp.ne.s32.totalorder %v1334, 0
        %vm1367 = vcmp.ne.s32.totalorder %v1335, 0
        %vm1368 = vcmp.ne.s32.totalorder %v1336, 0
        %vm1369 = vcmp.ne.s32.totalorder %v1337, 0
        %vm1370 = vcmp.ne.s32.totalorder %v1338, 0
        %vm1371 = vcmp.ne.s32.totalorder %v1339, 0
        %vm1372 = vcmp.ne.s32.totalorder %v1340, 0
        %vm1373 = vcmp.ne.s32.totalorder %v1341, 0
        %vm1374 = vcmp.ne.s32.totalorder %v1342, 0
        %vm1375 = vcmp.ne.s32.totalorder %v1343, 0
        %vm1376 = vcmp.ne.s32.totalorder %v1344, 0
        %vm1377 = vcmp.ne.s32.totalorder %v1345, 0
        %vm1378 = vcmp.ne.s32.totalorder %v1346, 0
        %vm1379 = vcmp.ne.s32.totalorder %v1347, 0
        %vm1380 = vcmp.ne.s32.totalorder %v1348, 0
        %vm1381 = vcmp.ne.s32.totalorder %v1349, 0
        %vm1382 = vcmp.ne.s32.totalorder %v1350, 0
        %vm1383 = vcmp.ne.s32.totalorder %v1351, 0
        %vm1384 = vcmp.ne.s32.totalorder %v1352, 0
        %vm1385 = vcmp.ne.s32.totalorder %v1353, 0
        %vm1386 = vcmp.ne.s32.totalorder %v1354, 0
        %vm1387 = vcmp.ne.s32.totalorder %v1355, 0
        %vm1388 = vcmp.ne.s32.totalorder %v1356, 0
        %vm1389 = vcmp.ne.s32.totalorder %v1357, 0
        %vm1390 = vcmp.ne.s32.totalorder %v1358, 0
        %vm1391 = vcmp.ne.s32.totalorder %v1359, 0
        %vm1392 = vcmp.ne.s32.totalorder %v1360, 0
        %vm1393 = vcmp.ne.s32.totalorder %v1361, 0
        %vm1394 = vmand %vm1298, %vm1362
        %vm1395 = vmand %vm1299, %vm1363
        %vm1396 = vmand %vm1300, %vm1364
        %vm1397 = vmand %vm1301, %vm1365
        %vm1398 = vmand %vm1302, %vm1366
        %vm1399 = vmand %vm1303, %vm1367
        %vm1400 = vmand %vm1304, %vm1368
        %vm1401 = vmand %vm1305, %vm1369
        %vm1402 = vmand %vm1306, %vm1370
        %vm1403 = vmand %vm1307, %vm1371
        %vm1404 = vmand %vm1308, %vm1372
        %vm1405 = vmand %vm1309, %vm1373
        %vm1406 = vmand %vm1310, %vm1374
        %vm1407 = vmand %vm1311, %vm1375
        %vm1408 = vmand %vm1312, %vm1376
        %vm1409 = vmand %vm1313, %vm1377
        %vm1410 = vmand %vm1314, %vm1378
        %vm1411 = vmand %vm1315, %vm1379
        %vm1412 = vmand %vm1316, %vm1380
        %vm1413 = vmand %vm1317, %vm1381
        %vm1414 = vmand %vm1318, %vm1382
        %vm1415 = vmand %vm1319, %vm1383
        %vm1416 = vmand %vm1320, %vm1384
        %vm1417 = vmand %vm1321, %vm1385
        %vm1418 = vmand %vm1322, %vm1386
        %vm1419 = vmand %vm1323, %vm1387
        %vm1420 = vmand %vm1324, %vm1388
        %vm1421 = vmand %vm1325, %vm1389
        %vm1422 = vmand %vm1326, %vm1390
        %vm1423 = vmand %vm1327, %vm1391
        %vm1424 = vmand %vm1328, %vm1392
        %vm1425 = vmand %vm1329, %vm1393
        %v1426 = vsel %vm1394, 0.5, 0.0
        %v1427 = vsel %vm1395, 0.5, 0.0
        %v1428 = vsel %vm1396, 0.5, 0.0
        %v1429 = vsel %vm1397, 0.5, 0.0
        %v1430 = vsel %vm1398, 0.5, 0.0
        %v1431 = vsel %vm1399, 0.5, 0.0
        %v1432 = vsel %vm1400, 0.5, 0.0
        %v1433 = vsel %vm1401, 0.5, 0.0
        %v1434 = vsel %vm1402, 0.5, 0.0
        %v1435 = vsel %vm1403, 0.5, 0.0
        %v1436 = vsel %vm1404, 0.5, 0.0
        %v1437 = vsel %vm1405, 0.5, 0.0
        %v1438 = vsel %vm1406, 0.5, 0.0
        %v1439 = vsel %vm1407, 0.5, 0.0
        %v1440 = vsel %vm1408, 0.5, 0.0
        %v1441 = vsel %vm1409, 0.5, 0.0
        %v1442 = vsel %vm1410, 0.5, 0.0
        %v1443 = vsel %vm1411, 0.5, 0.0
        %v1444 = vsel %vm1412, 0.5, 0.0
        %v1445 = vsel %vm1413, 0.5, 0.0
        %v1446 = vsel %vm1414, 0.5, 0.0
        %v1447 = vsel %vm1415, 0.5, 0.0
        %v1448 = vsel %vm1416, 0.5, 0.0
        %v1449 = vsel %vm1417, 0.5, 0.0
        %v1450 = vsel %vm1418, 0.5, 0.0
        %v1451 = vsel %vm1419, 0.5, 0.0
        %v1452 = vsel %vm1420, 0.5, 0.0
        %v1453 = vsel %vm1421, 0.5, 0.0
        %v1454 = vsel %vm1422, 0.5, 0.0
        %v1455 = vsel %vm1423, 0.5, 0.0
        %v1456 = vsel %vm1424, 0.5, 0.0
        %v1457 = vsel %vm1425, 0.5, 0.0
        %s1458 = sadd.s32 %s108, 128
        %p1459 = scmp.gt.s32.totalorder %s1458, 0
        %p1460 = scmp.lt.s32.totalorder %s108, 256
        %p1461 = pnand %p1459, %p1460
        %p1462 = pneg %p1461
        // Predicated region
        $region29: #{tpu_custom_call.1} parent=23 // pred_check
          _
        $region30: #{tpu_custom_call.1} parent=23 // pred_check_branch
          %1464 = sbr.rel (%p1461) target = $region32
        $region31: #{tpu_custom_call.1} parent=23 // pred_region
          %vm1465 = vcmp.eq.s32.totalorder %v1138, 0
          %vm1466 = vcmp.eq.s32.totalorder %v1139, 0
          %vm1467 = vcmp.eq.s32.totalorder %v1140, 0
          %vm1468 = vcmp.eq.s32.totalorder %v1141, 0
          %vm1469 = vcmp.eq.s32.totalorder %v1142, 0
          %vm1470 = vcmp.eq.s32.totalorder %v1143, 0
          %vm1471 = vcmp.eq.s32.totalorder %v1144, 0
          %vm1472 = vcmp.eq.s32.totalorder %v1145, 0
          %vm1473 = vcmp.eq.s32.totalorder %v1146, 0
          %vm1474 = vcmp.eq.s32.totalorder %v1147, 0
          %vm1475 = vcmp.eq.s32.totalorder %v1148, 0
          %vm1476 = vcmp.eq.s32.totalorder %v1149, 0
          %vm1477 = vcmp.eq.s32.totalorder %v1150, 0
          %vm1478 = vcmp.eq.s32.totalorder %v1151, 0
          %vm1479 = vcmp.eq.s32.totalorder %v1152, 0
          %vm1480 = vcmp.eq.s32.totalorder %v1153, 0
          %vm1481 = vcmp.eq.s32.totalorder %v1154, 0
          %vm1482 = vcmp.eq.s32.totalorder %v1155, 0
          %vm1483 = vcmp.eq.s32.totalorder %v1156, 0
          %vm1484 = vcmp.eq.s32.totalorder %v1157, 0
          %vm1485 = vcmp.eq.s32.totalorder %v1158, 0
          %vm1486 = vcmp.eq.s32.totalorder %v1159, 0
          %vm1487 = vcmp.eq.s32.totalorder %v1160, 0
          %vm1488 = vcmp.eq.s32.totalorder %v1161, 0
          %vm1489 = vcmp.eq.s32.totalorder %v1162, 0
          %vm1490 = vcmp.eq.s32.totalorder %v1163, 0
          %vm1491 = vcmp.eq.s32.totalorder %v1164, 0
          %vm1492 = vcmp.eq.s32.totalorder %v1165, 0
          %vm1493 = vcmp.eq.s32.totalorder %v1166, 0
          %vm1494 = vcmp.eq.s32.totalorder %v1167, 0
          %vm1495 = vcmp.eq.s32.totalorder %v1168, 0
          %vm1496 = vcmp.eq.s32.totalorder %v1169, 0
          %v1497 = vsel %vm1465, %v1103, %v1426
          %v1498 = vsel %vm1466, %v1103, %v1427
          %v1499 = vsel %vm1467, %v1104, %v1428
          %v1500 = vsel %vm1468, %v1104, %v1429
          %v1501 = vsel %vm1469, %v1105, %v1430
          %v1502 = vsel %vm1470, %v1105, %v1431
          %v1503 = vsel %vm1471, %v1106, %v1432
          %v1504 = vsel %vm1472, %v1106, %v1433
          %v1505 = vsel %vm1473, %v1107, %v1434
          %v1506 = vsel %vm1474, %v1107, %v1435
          %v1507 = vsel %vm1475, %v1108, %v1436
          %v1508 = vsel %vm1476, %v1108, %v1437
          %v1509 = vsel %vm1477, %v1109, %v1438
          %v1510 = vsel %vm1478, %v1109, %v1439
          %v1511 = vsel %vm1479, %v1110, %v1440
          %v1512 = vsel %vm1480, %v1110, %v1441
          %v1513 = vsel %vm1481, %v1111, %v1442
          %v1514 = vsel %vm1482, %v1111, %v1443
          %v1515 = vsel %vm1483, %v1112, %v1444
          %v1516 = vsel %vm1484, %v1112, %v1445
          %v1517 = vsel %vm1485, %v1113, %v1446
          %v1518 = vsel %vm1486, %v1113, %v1447
          %v1519 = vsel %vm1487, %v1114, %v1448
          %v1520 = vsel %vm1488, %v1114, %v1449
          %v1521 = vsel %vm1489, %v1115, %v1450
          %v1522 = vsel %vm1490, %v1115, %v1451
          %v1523 = vsel %vm1491, %v1116, %v1452
          %v1524 = vsel %vm1492, %v1116, %v1453
          %v1525 = vsel %vm1493, %v1117, %v1454
          %v1526 = vsel %vm1494, %v1117, %v1455
          %v1527 = vsel %vm1495, %v1118, %v1456
          %v1528 = vsel %vm1496, %v1118, %v1457
          %1529 = vst [vmem:[%s106] sm:$0xff] %v1497
          %1530 = vst [vmem:[%s106 + $0x8] sm:$0xff] %v1498
          %1531 = vst [vmem:[%s106 + $0x10] sm:$0xff] %v1499
          %1532 = vst [vmem:[%s106 + $0x18] sm:$0xff] %v1500
          %1533 = vst [vmem:[%s106 + $0x20] sm:$0xff] %v1501
          %1534 = vst [vmem:[%s106 + $0x28] sm:$0xff] %v1502
          %1535 = vst [vmem:[%s106 + $0x30] sm:$0xff] %v1503
          %1536 = vst [vmem:[%s106 + $0x38] sm:$0xff] %v1504
          %1537 = vst [vmem:[%s106 + $0x40] sm:$0xff] %v1505
          %1538 = vst [vmem:[%s106 + $0x48] sm:$0xff] %v1506
          %1539 = vst [vmem:[%s106 + $0x50] sm:$0xff] %v1507
          %1540 = vst [vmem:[%s106 + $0x58] sm:$0xff] %v1508
          %1541 = vst [vmem:[%s106 + $0x60] sm:$0xff] %v1509
          %1542 = vst [vmem:[%s106 + $0x68] sm:$0xff] %v1510
          %1543 = vst [vmem:[%s106 + $0x70] sm:$0xff] %v1511
          %1544 = vst [vmem:[%s106 + $0x78] sm:$0xff] %v1512
          %1545 = vst [vmem:[%s106 + $0x80] sm:$0xff] %v1513
          %1546 = vst [vmem:[%s106 + $0x88] sm:$0xff] %v1514
          %1547 = vst [vmem:[%s106 + $0x90] sm:$0xff] %v1515
          %1548 = vst [vmem:[%s106 + $0x98] sm:$0xff] %v1516
          %1549 = vst [vmem:[%s106 + $0xa0] sm:$0xff] %v1517
          %1550 = vst [vmem:[%s106 + $0xa8] sm:$0xff] %v1518
          %1551 = vst [vmem:[%s106 + $0xb0] sm:$0xff] %v1519
          %1552 = vst [vmem:[%s106 + $0xb8] sm:$0xff] %v1520
          %1553 = vst [vmem:[%s106 + $0xc0] sm:$0xff] %v1521
          %1554 = vst [vmem:[%s106 + $0xc8] sm:$0xff] %v1522
          %1555 = vst [vmem:[%s106 + $0xd0] sm:$0xff] %v1523
          %1556 = vst [vmem:[%s106 + $0xd8] sm:$0xff] %v1524
          %1557 = vst [vmem:[%s106 + $0xe0] sm:$0xff] %v1525
          %1558 = vst [vmem:[%s106 + $0xe8] sm:$0xff] %v1526
          %1559 = vst [vmem:[%s106 + $0xf0] sm:$0xff] %v1527
          %1560 = vst [vmem:[%s106 + $0xf8] sm:$0xff] %v1528
        $region32: #{tpu_custom_call.1} parent=23 // pred_fallthru
          _
        %p1561 = pneg %p1462
        // Predicated region
        $region33: #{tpu_custom_call.1} parent=23 // pred_check
          _
        $region34: #{tpu_custom_call.1} parent=23 // pred_check_branch
          %1563 = sbr.rel (%p1462) target = $region36
        $region35: #{tpu_custom_call.1} parent=23 // pred_region
          %1564 = vst [vmem:[%s106] sm:$0xff] %v1426
          %1565 = vst [vmem:[%s106 + $0x8] sm:$0xff] %v1427
          %1566 = vst [vmem:[%s106 + $0x10] sm:$0xff] %v1428
          %1567 = vst [vmem:[%s106 + $0x18] sm:$0xff] %v1429
          %1568 = vst [vmem:[%s106 + $0x20] sm:$0xff] %v1430
          %1569 = vst [vmem:[%s106 + $0x28] sm:$0xff] %v1431
          %1570 = vst [vmem:[%s106 + $0x30] sm:$0xff] %v1432
          %1571 = vst [vmem:[%s106 + $0x38] sm:$0xff] %v1433
          %1572 = vst [vmem:[%s106 + $0x40] sm:$0xff] %v1434
          %1573 = vst [vmem:[%s106 + $0x48] sm:$0xff] %v1435
          %1574 = vst [vmem:[%s106 + $0x50] sm:$0xff] %v1436
          %1575 = vst [vmem:[%s106 + $0x58] sm:$0xff] %v1437
          %1576 = vst [vmem:[%s106 + $0x60] sm:$0xff] %v1438
          %1577 = vst [vmem:[%s106 + $0x68] sm:$0xff] %v1439
          %1578 = vst [vmem:[%s106 + $0x70] sm:$0xff] %v1440
          %1579 = vst [vmem:[%s106 + $0x78] sm:$0xff] %v1441
          %1580 = vst [vmem:[%s106 + $0x80] sm:$0xff] %v1442
          %1581 = vst [vmem:[%s106 + $0x88] sm:$0xff] %v1443
          %1582 = vst [vmem:[%s106 + $0x90] sm:$0xff] %v1444
          %1583 = vst [vmem:[%s106 + $0x98] sm:$0xff] %v1445
          %1584 = vst [vmem:[%s106 + $0xa0] sm:$0xff] %v1446
          %1585 = vst [vmem:[%s106 + $0xa8] sm:$0xff] %v1447
          %1586 = vst [vmem:[%s106 + $0xb0] sm:$0xff] %v1448
          %1587 = vst [vmem:[%s106 + $0xb8] sm:$0xff] %v1449
          %1588 = vst [vmem:[%s106 + $0xc0] sm:$0xff] %v1450
          %1589 = vst [vmem:[%s106 + $0xc8] sm:$0xff] %v1451
          %1590 = vst [vmem:[%s106 + $0xd0] sm:$0xff] %v1452
          %1591 = vst [vmem:[%s106 + $0xd8] sm:$0xff] %v1453
          %1592 = vst [vmem:[%s106 + $0xe0] sm:$0xff] %v1454
          %1593 = vst [vmem:[%s106 + $0xe8] sm:$0xff] %v1455
          %1594 = vst [vmem:[%s106 + $0xf0] sm:$0xff] %v1456
          %1595 = vst [vmem:[%s106 + $0xf8] sm:$0xff] %v1457
        $region36: #{tpu_custom_call.1} parent=23 // pred_fallthru
          _
        %s1596 = sand.u32 %s45, 1
        %s1597 = scalar_lea.sflag [#allocation3], %s1596
        %s1598 = sand.u32 %s45, 1
        %s1599 = smul.addr %s1598, 256
        %s1600 = scalar_lea.vmem [#allocation5], %s1599
        // Predicated region
        $region37: #{tpu_custom_call.1} parent=23 // pred_check
          %p1601 = pneg %p55
        $region38: #{tpu_custom_call.1} parent=23 // pred_check_branch
          %1603 = sbr.rel (%p1601) target = $region40
        $region39: #{tpu_custom_call.1} parent=23 // pred_region
          %s1604 = smul.u32 16, %s16
          %s1606 = ssub.s32 4096, 4096
          %1607 = vsyncadd %s1597, %s1606
          %s1608 = smul.addr %s1604, 2
          %s1609 = smul.addr %s1608, 128
          %s1610 = scalar_lea.hbm %s1, %s1609
          %s1611 = sshll.u32 %s1600, 4
          %s1612 = int_to_ptr.vmem [resolvable:$true] %s1611
          %1617 = dma.vmem_to_hbm [thread:$0]  %s1612, 4096, %s1610, %s1597, 256, 256, 16
        $region40: #{tpu_custom_call.1} parent=23 // pred_fallthru
          _
      $region24: #{tpu_custom_call.1} parent=5 // pred_fallthru
        _
      %p1618 = scmp.le.s32.totalorder 2, %s11
      // Predicated region
      $region41: #{tpu_custom_call.1} parent=5 // pred_check
        %p1619 = pneg %p1618
      $region42: #{tpu_custom_call.1} parent=5 // pred_check_branch
        %1621 = sbr.rel (%p1619) target = $region44
      $region43: #{tpu_custom_call.1} parent=5 // pred_region
        %s1622 = ssub.s32 %s11, 2
        // Predicated region
        $region45: #{tpu_custom_call.1} parent=43 // pred_check
          %p1623 = pneg %p61
        $region46: #{tpu_custom_call.1} parent=43 // pred_check_branch
          %1625 = sbr.rel (%p1623) target = $region48
        $region47: #{tpu_custom_call.1} parent=43 // pred_region
          %s1626 = sand.u32 %s46, 1
          %s1627 = scalar_lea.sflag [#allocation3], %s1626
          %s1628 = sand.u32 %s46, 1
          %s1629 = smul.addr %s1628, 256
          %s1630 = scalar_lea.vmem [#allocation5], %s1629
          %1631 = dma.done %s1627, 4096
        $region48: #{tpu_custom_call.1} parent=43 // pred_fallthru
          _
      $region44: #{tpu_custom_call.1} parent=5 // pred_fallthru
        _
    $region6: #{tpu_custom_call.1} parent=1 // loop_footer
      %s15 = sadd.s32 1, %s11
    $region7: #{tpu_custom_call.1} parent=1 // loop_footer_branch
      %10 = sbr.rel target = $region3
    $region8: #{tpu_custom_call.1} parent=1 // loop_exit
      _
    %1632 = vsyncpa [#allocation3], 1
    %s1633 = scalar_lea.sflag [#allocation3], 1
    %1634 = vsyncpa %s1633, 1
    %1635 = vsyncpa [#allocation4], 1
    %s1636 = scalar_lea.sflag [#allocation4], 1
    %1637 = vsyncpa %s1636, 1

</llo_original>
